<compile_context>
chip_gen: v7x
topology: tpu7x:2x2x1
jax: 0.10.0
libtpu: 0.0.40
codegen_flags: <defaults>
</compile_context>

<pallas_src>
import math
import numpy as np
import jax
import jax.numpy as jnp
from jax.experimental import pallas as pl
from jax.experimental.pallas import tpu as pltpu

# ----- model hyper-parameters (mirrors SPNNet(in_features, n_labels, n_mv=2)) -----
IN_CH, H, W = 4, 16, 16
IN_FEATURES = IN_CH * H * W          # 1024 (x.view(N, -1))
HIDDEN = 32                          # fc1 output
SPN_OUT = 20                         # SPNLayer out_features (20 SPN neurons)
N_LABELS = 4
N_MV = 2                             # gaussians per sum node
N_PAIRS = HIDDEN // 2                # 16 (scope pairs per neuron)
NP = SPN_OUT * N_PAIRS               # 320 (neuron, pair) slots
NP_PAD = 384                         # 3 * 128 -> lane-aligned padding of NP
OUT_DIM = 10 * N_LABELS              # fc2 output, viewed as (N, 10, n_labels)
OUT_PAD = 128                        # lane-dense padded output width (host slices [:, :40])

LOG_2PI = math.log(2.0 * math.pi)
TILE_B = 1024                        # batch rows per grid step (~25-30 MiB working set)


def _round_up(x, m):
    return (x + m - 1) // m * m


# --------------------------------------------------------------------------------------
# kernel
# --------------------------------------------------------------------------------------
def spnnet_kernel(x_ref, w1_ref, b1_ref, sel_ref, mu_ref, isig_ref, bias_ref,
                  pw2_ref, b2_ref, rep_ref, summat_ref, out_ref):
    # fc1: cast the f32 x tile to bf16 in VMEM (no wrapper-side convert), MXU with f32 acc.
    h1 = jnp.dot(x_ref[...].astype(jnp.bfloat16), w1_ref[...],
                 preferred_element_type=jnp.float32)
    h1 = jnp.maximum(h1 + b1_ref[...], 0.0)                                  # (TB, 32) f32

    # fused one-hot scope gather (bf16, selector is exactly 0/1):
    # scope-a values in cols [0, NP_PAD), scope-b in [NP_PAD, 2*NP_PAD)
    xab = jnp.dot(h1.astype(jnp.bfloat16), sel_ref[...],
                  preferred_element_type=jnp.float32)                        # (TB, 2*NP_PAD)

    mu = mu_ref[...]        # (N_MV, 2*NP_PAD)
    isig = isig_ref[...]    # (N_MV, 2*NP_PAD) = 1/(sigma*sqrt(2))  (finite in padded cols)
    bias = bias_ref[...]    # (N_MV, NP_PAD)   = -log(siga)-log(sigb)-log(2pi)+logw

    # per-mixture-component product node: logN(xa) + logN(xb) + log w
    # (0.5 folded into isig on the host -> comp = bias - za^2 - zb^2)
    comp = []
    for m in range(N_MV):
        z = (xab - mu[m:m + 1, :]) * isig[m:m + 1, :]
        zz = z * z                                                           # (TB, 2*NP_PAD)
        comp.append(bias[m:m + 1, :] - zz[:, :NP_PAD] - zz[:, NP_PAD:])      # (TB, NP_PAD)

    # sum node = logsumexp over mixture components (specialized for N_MV == 2)
    if N_MV == 2:
        l0, l1 = comp
        sumnodes = jnp.maximum(l0, l1) + jnp.log(1.0 + jnp.exp(-jnp.abs(l0 - l1)))
    else:
        mmax = comp[0]
        for c in comp[1:]:
            mmax = jnp.maximum(mmax, c)
        acc = jnp.zeros_like(mmax)
        for c in comp:
            acc = acc + jnp.exp(c - mmax)
        sumnodes = mmax + jnp.log(acc)                                       # (TB, NP_PAD)

    # root product node + fc2 folded into one matmul (psum @ w2, zero-padded to 128 lanes)
    logits = jnp.dot(sumnodes, pw2_ref[...],
                     preferred_element_type=jnp.float32) + b2_ref[...]       # (TB, OUT_PAD)

    # log_softmax over dim=1 of view(-1, 10, n_labels), flat layout, dense epilogue:
    #   gmax (TB,4) -> broadcast via 0/1 rep matmul -> ONE dense exp -> per-group sum via a
    #   0/1 (128,4) matmul -> one (TB,4) log -> broadcast back -> ONE lane-dense store.
    gmax = logits[:, 0:N_LABELS]
    for g in range(1, 10):
        gmax = jnp.maximum(gmax, logits[:, g * N_LABELS:(g + 1) * N_LABELS])  # (TB, 4)
    gmax_full = jnp.dot(gmax, rep_ref[...],
                        preferred_element_type=jnp.float32)                  # (TB, OUT_PAD)
    e = jnp.exp(logits - gmax_full)                                          # padded cols: exp(0)=1
    s = jnp.dot(e, summat_ref[...],
                preferred_element_type=jnp.float32)                          # (TB, 4) per-group sums
    den_full = gmax_full + jnp.dot(jnp.log(s), rep_ref[...],
                                   preferred_element_type=jnp.float32)       # (TB, OUT_PAD)
    out_ref[...] = logits - den_full                                         # padded cols stay 0


# --------------------------------------------------------------------------------------
# parameter construction (deterministic synthetic params matching the module's shapes)
# --------------------------------------------------------------------------------------
def build_raw_params(seed=0):
    rng = np.random.RandomState(seed)
    # fc1 (kaiming-normal weight, zero bias)
    w1 = (rng.randn(IN_FEATURES, HIDDEN) * math.sqrt(2.0 / IN_FEATURES)).astype(np.float32)
    b1 = np.zeros((1, HIDDEN), np.float32)

    # SPN structure: per neuron, a random permutation of the 32 hidden features
    sela = np.zeros((HIDDEN, NP), np.float32)   # one-hot selector for scope 1 of each pair
    selb = np.zeros((HIDDEN, NP), np.float32)   # one-hot selector for scope 2 of each pair
    psum = np.zeros((NP, SPN_OUT), np.float32)  # sums pair log-liks into each neuron
    for o in range(SPN_OUT):
        perm = rng.permutation(HIDDEN)
        for p in range(N_PAIRS):
            col = o * N_PAIRS + p
            sela[perm[2 * p], col] = 1.0
            selb[perm[2 * p + 1], col] = 1.0
            psum[col, o] = 1.0

    # Gaussian leaf parameters and normalized sum-node weights
    mua = rng.randn(N_MV, NP).astype(np.float32)
    mub = rng.randn(N_MV, NP).astype(np.float32)
    siga = (1.0 + 0.25 * np.abs(rng.randn(N_MV, NP))).astype(np.float32)
    sigb = (1.0 + 0.25 * np.abs(rng.randn(N_MV, NP))).astype(np.float32)
    wraw = rng.rand(N_MV, NP).astype(np.float32) + 0.1
    logw = np.log(wraw / wraw.sum(axis=0, keepdims=True)).astype(np.float32)

    # fc2
    w2 = (rng.randn(SPN_OUT, OUT_DIM) * math.sqrt(2.0 / SPN_OUT)).astype(np.float32)
    b2 = np.zeros((1, OUT_DIM), np.float32)

    return dict(w1=w1, b1=b1, sela=sela, selb=selb, mua=mua, siga=siga,
                mub=mub, sigb=sigb, logw=logw, psum=psum, w2=w2, b2=b2)


def prepare_kernel_params(raw):
    """Host-side precompute: fused/padded selector, Gaussian constants, folded/padded fc2."""
    # fused one-hot selector: scope-a columns [0, NP), scope-b columns [NP_PAD, NP_PAD+NP)
    sel = np.zeros((HIDDEN, 2 * NP_PAD), np.float32)
    sel[:, :NP] = raw["sela"]
    sel[:, NP_PAD:NP_PAD + NP] = raw["selb"]

    mu = np.zeros((N_MV, 2 * NP_PAD), np.float32)
    mu[:, :NP] = raw["mua"]
    mu[:, NP_PAD:NP_PAD + NP] = raw["mub"]

    # 0.5 folded into 1/sigma: isig = 1/(sigma*sqrt(2)); finite value in padded columns.
    inv_sqrt2 = 1.0 / math.sqrt(2.0)
    isig = np.full((N_MV, 2 * NP_PAD), inv_sqrt2, np.float32)
    isig[:, :NP] = inv_sqrt2 / raw["siga"]
    isig[:, NP_PAD:NP_PAD + NP] = inv_sqrt2 / raw["sigb"]

    bias = np.zeros((N_MV, NP_PAD), np.float32)
    bias[:, :NP] = (-np.log(raw["siga"]) - np.log(raw["sigb"]) - LOG_2PI + raw["logw"])

    # fold fc2 into the pair-sum matrix and pad to 128 output lanes; padded sumnodes columns
    # evaluate to log(2) but hit exactly-zero rows here, so they contribute nothing.
    psum_pad = np.zeros((NP_PAD, SPN_OUT), np.float32)
    psum_pad[:NP] = raw["psum"]
    pw2 = np.zeros((NP_PAD, OUT_PAD), np.float32)
    pw2[:, :OUT_DIM] = psum_pad @ raw["w2"]

    b2 = np.zeros((1, OUT_PAD), np.float32)
    b2[:, :OUT_DIM] = raw["b2"]

    # 0/1 replicate matrix (N_LABELS -> 10 groups) and block-diagonal group-sum matrix.
    rep = np.zeros((N_LABELS, OUT_PAD), np.float32)
    summat = np.zeros((OUT_PAD, N_LABELS), np.float32)
    for g in range(10):
        rep[np.arange(N_LABELS), g * N_LABELS + np.arange(N_LABELS)] = 1.0
        summat[g * N_LABELS + np.arange(N_LABELS), np.arange(N_LABELS)] = 1.0

    return (
        jnp.asarray(raw["w1"], jnp.bfloat16),   # w1 (bf16 MXU input)
        jnp.asarray(raw["b1"]),                 # b1
        jnp.asarray(sel, jnp.bfloat16),         # fused one-hot selector (0/1 exact in bf16)
        jnp.asarray(mu),                        # gaussian means (padded, fused a||b)
        jnp.asarray(isig),                      # 1/(sigma*sqrt(2)) (padded, fused a||b)
        jnp.asarray(bias),                      # -log(siga)-log(sigb)-log(2pi)+logw
        jnp.asarray(pw2),                       # folded pair-sum @ fc2, padded to 128 lanes
        jnp.asarray(b2),                        # b2 padded to 128 lanes
        jnp.asarray(rep),                       # log_softmax denominator replicator
        jnp.asarray(summat),                    # per-group sum matrix for the dense epilogue
    )


# --------------------------------------------------------------------------------------
# wrapper
# --------------------------------------------------------------------------------------
@jax.jit
def spnnet_forward(x, params):
    n = x.shape[0]
    x2d = x.reshape(n, -1)                                # x.view(N, -1); stays f32 (no extra convert op)
    # at least 2 grid steps for any batch > 8 rows so the parallel axis uses both v7x TCs
    tb = min(TILE_B, _round_up(max((n + 1) // 2, 1), 8))
    n_pad = _round_up(n, tb)
    if n_pad != n:
        x2d = jnp.pad(x2d, ((0, n_pad - n), (0, 0)))      # ragged last tile -> zero-pad rows

    flat = pl.pallas_call(
        spnnet_kernel,
        out_shape=jax.ShapeDtypeStruct((n_pad, OUT_PAD), jnp.float32),
        grid=(n_pad // tb,),
        in_specs=[pl.BlockSpec((tb, IN_FEATURES), lambda i: (i, 0))] +
                 [pl.BlockSpec(p.shape, lambda i: (0, 0)) for p in params],
        out_specs=pl.BlockSpec((tb, OUT_PAD), lambda i: (i, 0)),
        compiler_params=pltpu.CompilerParams(
            dimension_semantics=("parallel",),
            vmem_limit_bytes=40 * 1024 * 1024),           # sized to working set; < v7x 64 MiB physical
    )(x2d, *params)

    return flat[:n, :OUT_DIM].reshape(n, 10, N_LABELS)    # view(-1, 10, n_labels)


# --------------------------------------------------------------------------------------
# pure-JAX reference of the same forward pass (mirrors the kernel's mixed precision)
# --------------------------------------------------------------------------------------
def reference(x, raw):
    x2d = x.reshape(x.shape[0], -1)
    h1 = jnp.dot(x2d.astype(jnp.bfloat16), jnp.asarray(raw["w1"], jnp.bfloat16),
                 preferred_element_type=jnp.float32)
    h1 = jax.nn.relu(h1 + raw["b1"])
    h1b = h1.astype(jnp.bfloat16)                                  # kernel gathers bf16 h1
    xa = jnp.dot(h1b, jnp.asarray(raw["sela"], jnp.bfloat16), preferred_element_type=jnp.float32)
    xb = jnp.dot(h1b, jnp.asarray(raw["selb"], jnp.bfloat16), preferred_element_type=jnp.float32)
    lla = (-0.5 * ((xa[:, None, :] - raw["mua"][None]) / raw["siga"][None]) ** 2
           - jnp.log(raw["siga"][None]) - 0.5 * LOG_2PI)
    llb = (-0.5 * ((xb[:, None, :] - raw["mub"][None]) / raw["sigb"][None]) ** 2
           - jnp.log(raw["sigb"][None]) - 0.5 * LOG_2PI)
    sumnodes = jax.scipy.special.logsumexp(lla + llb + raw["logw"][None], axis=1)
    logits = jnp.dot(jnp.dot(sumnodes, raw["psum"], precision=jax.lax.Precision.HIGHEST),
                     raw["w2"], precision=jax.lax.Precision.HIGHEST) + raw["b2"]
    logits = logits.reshape(-1, 10, N_LABELS)
    return jax.nn.log_softmax(logits, axis=1)


if __name__ == "__main__":
    key = jax.random.PRNGKey(0)
    x = jax.random.normal(key, (2, IN_CH, H, W), dtype=jnp.float32)   # NCHW, as in PyTorch
    raw = build_raw_params(seed=0)
    params = prepare_kernel_params(raw)

    out = spnnet_forward(x, params)
    out = jax.block_until_ready(out)

    ref = reference(x, raw)
    np.testing.assert_allclose(np.asarray(out), np.asarray(ref), rtol=2e-3, atol=2e-3)
    assert out.shape == (2, 10, N_LABELS)
    print("KERNEL_OK")
</pallas_src>

<mosaic_0001>
module attributes {stable_mosaic.version = 11 : i64} {
  func.func @spnnet_kernel(%arg0: i32, %arg1: memref<8x1024xf32, #tpu.memory_space<vmem>>, %arg2: memref<1024x32xbf16, #tpu.memory_space<vmem>>, %arg3: memref<1x32xf32, #tpu.memory_space<vmem>>, %arg4: memref<32x768xbf16, #tpu.memory_space<vmem>>, %arg5: memref<2x768xf32, #tpu.memory_space<vmem>>, %arg6: memref<2x768xf32, #tpu.memory_space<vmem>>, %arg7: memref<2x384xf32, #tpu.memory_space<vmem>>, %arg8: memref<384x128xf32, #tpu.memory_space<vmem>>, %arg9: memref<1x128xf32, #tpu.memory_space<vmem>>, %arg10: memref<4x128xf32, #tpu.memory_space<vmem>>, %arg11: memref<128x4xf32, #tpu.memory_space<vmem>>, %arg12: memref<8x128xf32, #tpu.memory_space<vmem>>) attributes {dimension_semantics = [#tpu.dimension_semantics<parallel>], iteration_bounds = array<i64: 1>, scalar_prefetch = 0 : i64, scratch_operands = 0 : i64, tpu.core_type = #tpu.core_type<tc>, window_params = [{transform_indices = @transform_0, window_bounds = array<i64: 8, 1024>}, {pipeline_mode = #tpu.pipeline_mode<synchronous>, transform_indices = @transform_1, window_bounds = array<i64: 1024, 32>}, {pipeline_mode = #tpu.pipeline_mode<synchronous>, transform_indices = @transform_2, window_bounds = array<i64: 1, 32>}, {pipeline_mode = #tpu.pipeline_mode<synchronous>, transform_indices = @transform_3, window_bounds = array<i64: 32, 768>}, {pipeline_mode = #tpu.pipeline_mode<synchronous>, transform_indices = @transform_4, window_bounds = array<i64: 2, 768>}, {pipeline_mode = #tpu.pipeline_mode<synchronous>, transform_indices = @transform_5, window_bounds = array<i64: 2, 768>}, {pipeline_mode = #tpu.pipeline_mode<synchronous>, transform_indices = @transform_6, window_bounds = array<i64: 2, 384>}, {pipeline_mode = #tpu.pipeline_mode<synchronous>, transform_indices = @transform_7, window_bounds = array<i64: 384, 128>}, {pipeline_mode = #tpu.pipeline_mode<synchronous>, transform_indices = @transform_8, window_bounds = array<i64: 1, 128>}, {pipeline_mode = #tpu.pipeline_mode<synchronous>, transform_indices = @transform_9, window_bounds = array<i64: 4, 128>}, {pipeline_mode = #tpu.pipeline_mode<synchronous>, transform_indices = @transform_10, window_bounds = array<i64: 128, 4>}, {transform_indices = @transform_11, window_bounds = array<i64: 8, 128>}]} {
    %c0 = arith.constant 0 : index
    %c0_0 = arith.constant 0 : index
    %0 = vector.load %arg1[%c0, %c0_0] : memref<8x1024xf32, #tpu.memory_space<vmem>>, vector<8x1024xf32>
    %1 = arith.truncf %0 : vector<8x1024xf32> to vector<8x1024xbf16>
    %c0_1 = arith.constant 0 : index
    %c0_2 = arith.constant 0 : index
    %2 = vector.load %arg2[%c0_1, %c0_2] : memref<1024x32xbf16, #tpu.memory_space<vmem>>, vector<1024x32xbf16>
    %cst = arith.constant dense<0.000000e+00> : vector<8x32xf32>
    %3 = tpu.matmul %1, %2, %cst {dimension_numbers = #tpu.dot_dimension_numbers<[1], [0], [0], [1], [0, 0, 1, 1], [], []>} : vector<8x1024xbf16>, vector<1024x32xbf16>, vector<8x32xf32> -> vector<8x32xf32>
    %c0_3 = arith.constant 0 : index
    %c0_4 = arith.constant 0 : index
    %4 = vector.load %arg3[%c0_3, %c0_4] : memref<1x32xf32, #tpu.memory_space<vmem>>, vector<1x32xf32>
    %5 = vector.broadcast %4 : vector<1x32xf32> to vector<8x32xf32>
    %6 = arith.addf %3, %5 : vector<8x32xf32>
    %cst_5 = arith.constant 0.000000e+00 : f32
    %7 = vector.broadcast %cst_5 : f32 to vector<8x32xf32>
    %8 = arith.maximumf %6, %7 : vector<8x32xf32>
    %9 = arith.truncf %8 : vector<8x32xf32> to vector<8x32xbf16>
    %c0_6 = arith.constant 0 : index
    %c0_7 = arith.constant 0 : index
    %10 = vector.load %arg4[%c0_6, %c0_7] : memref<32x768xbf16, #tpu.memory_space<vmem>>, vector<32x768xbf16>
    %cst_8 = arith.constant dense<0.000000e+00> : vector<8x768xf32>
    %11 = tpu.matmul %9, %10, %cst_8 {dimension_numbers = #tpu.dot_dimension_numbers<[1], [0], [0], [1], [0, 0, 1, 1], [], []>} : vector<8x32xbf16>, vector<32x768xbf16>, vector<8x768xf32> -> vector<8x768xf32>
    %c0_9 = arith.constant 0 : index
    %c0_10 = arith.constant 0 : index
    %12 = vector.load %arg5[%c0_9, %c0_10] : memref<2x768xf32, #tpu.memory_space<vmem>>, vector<2x768xf32>
    %c0_11 = arith.constant 0 : index
    %c0_12 = arith.constant 0 : index
    %13 = vector.load %arg6[%c0_11, %c0_12] : memref<2x768xf32, #tpu.memory_space<vmem>>, vector<2x768xf32>
    %c0_13 = arith.constant 0 : index
    %c0_14 = arith.constant 0 : index
    %14 = vector.load %arg7[%c0_13, %c0_14] : memref<2x384xf32, #tpu.memory_space<vmem>>, vector<2x384xf32>
    %15 = vector.extract_strided_slice %12 {offsets = [0, 0], sizes = [1, 768], strides = [1, 1]} : vector<2x768xf32> to vector<1x768xf32>
    %16 = vector.broadcast %15 : vector<1x768xf32> to vector<8x768xf32>
    %17 = arith.subf %11, %16 : vector<8x768xf32>
    %18 = vector.extract_strided_slice %13 {offsets = [0, 0], sizes = [1, 768], strides = [1, 1]} : vector<2x768xf32> to vector<1x768xf32>
    %19 = vector.broadcast %18 : vector<1x768xf32> to vector<8x768xf32>
    %20 = arith.mulf %17, %19 : vector<8x768xf32>
    %21 = arith.mulf %20, %20 : vector<8x768xf32>
    %22 = vector.extract_strided_slice %14 {offsets = [0, 0], sizes = [1, 384], strides = [1, 1]} : vector<2x384xf32> to vector<1x384xf32>
    %23 = vector.extract_strided_slice %21 {offsets = [0, 0], sizes = [8, 384], strides = [1, 1]} : vector<8x768xf32> to vector<8x384xf32>
    %24 = vector.broadcast %22 : vector<1x384xf32> to vector<8x384xf32>
    %25 = arith.subf %24, %23 : vector<8x384xf32>
    %26 = vector.extract_strided_slice %21 {offsets = [0, 384], sizes = [8, 384], strides = [1, 1]} : vector<8x768xf32> to vector<8x384xf32>
    %27 = arith.subf %25, %26 : vector<8x384xf32>
    %28 = vector.extract_strided_slice %12 {offsets = [1, 0], sizes = [1, 768], strides = [1, 1]} : vector<2x768xf32> to vector<1x768xf32>
    %29 = vector.broadcast %28 : vector<1x768xf32> to vector<8x768xf32>
    %30 = arith.subf %11, %29 : vector<8x768xf32>
    %31 = vector.extract_strided_slice %13 {offsets = [1, 0], sizes = [1, 768], strides = [1, 1]} : vector<2x768xf32> to vector<1x768xf32>
    %32 = vector.broadcast %31 : vector<1x768xf32> to vector<8x768xf32>
    %33 = arith.mulf %30, %32 : vector<8x768xf32>
    %34 = arith.mulf %33, %33 : vector<8x768xf32>
    %35 = vector.extract_strided_slice %14 {offsets = [1, 0], sizes = [1, 384], strides = [1, 1]} : vector<2x384xf32> to vector<1x384xf32>
    %36 = vector.extract_strided_slice %34 {offsets = [0, 0], sizes = [8, 384], strides = [1, 1]} : vector<8x768xf32> to vector<8x384xf32>
    %37 = vector.broadcast %35 : vector<1x384xf32> to vector<8x384xf32>
    %38 = arith.subf %37, %36 : vector<8x384xf32>
    %39 = vector.extract_strided_slice %34 {offsets = [0, 384], sizes = [8, 384], strides = [1, 1]} : vector<8x768xf32> to vector<8x384xf32>
    %40 = arith.subf %38, %39 : vector<8x384xf32>
    %41 = arith.maximumf %27, %40 : vector<8x384xf32>
    %42 = arith.subf %27, %40 : vector<8x384xf32>
    %43 = math.absf %42 : vector<8x384xf32>
    %cst_15 = arith.constant 0.000000e+00 : f32
    %44 = vector.broadcast %cst_15 : f32 to vector<8x384xf32>
    %45 = arith.subf %44, %43 : vector<8x384xf32>
    %46 = math.exp %45 : vector<8x384xf32>
    %cst_16 = arith.constant 1.000000e+00 : f32
    %47 = vector.broadcast %cst_16 : f32 to vector<8x384xf32>
    %48 = arith.addf %47, %46 : vector<8x384xf32>
    %49 = math.log %48 : vector<8x384xf32>
    %50 = arith.addf %41, %49 : vector<8x384xf32>
    %c0_17 = arith.constant 0 : index
    %c0_18 = arith.constant 0 : index
    %51 = vector.load %arg8[%c0_17, %c0_18] : memref<384x128xf32, #tpu.memory_space<vmem>>, vector<384x128xf32>
    %cst_19 = arith.constant dense<0.000000e+00> : vector<8x128xf32>
    %52 = tpu.matmul %50, %51, %cst_19 {dimension_numbers = #tpu.dot_dimension_numbers<[1], [0], [0], [1], [0, 0, 1, 1], [], []>} : vector<8x384xf32>, vector<384x128xf32>, vector<8x128xf32> -> vector<8x128xf32>
    %c0_20 = arith.constant 0 : index
    %c0_21 = arith.constant 0 : index
    %53 = vector.load %arg9[%c0_20, %c0_21] : memref<1x128xf32, #tpu.memory_space<vmem>>, vector<1x128xf32>
    %54 = vector.broadcast %53 : vector<1x128xf32> to vector<8x128xf32>
    %55 = arith.addf %52, %54 : vector<8x128xf32>
    %56 = vector.extract_strided_slice %55 {offsets = [0, 0], sizes = [8, 4], strides = [1, 1]} : vector<8x128xf32> to vector<8x4xf32>
    %57 = vector.extract_strided_slice %55 {offsets = [0, 4], sizes = [8, 4], strides = [1, 1]} : vector<8x128xf32> to vector<8x4xf32>
    %58 = arith.maximumf %56, %57 : vector<8x4xf32>
    %59 = vector.extract_strided_slice %55 {offsets = [0, 8], sizes = [8, 4], strides = [1, 1]} : vector<8x128xf32> to vector<8x4xf32>
    %60 = arith.maximumf %58, %59 : vector<8x4xf32>
    %61 = vector.extract_strided_slice %55 {offsets = [0, 12], sizes = [8, 4], strides = [1, 1]} : vector<8x128xf32> to vector<8x4xf32>
    %62 = arith.maximumf %60, %61 : vector<8x4xf32>
    %63 = vector.extract_strided_slice %55 {offsets = [0, 16], sizes = [8, 4], strides = [1, 1]} : vector<8x128xf32> to vector<8x4xf32>
    %64 = arith.maximumf %62, %63 : vector<8x4xf32>
    %65 = vector.extract_strided_slice %55 {offsets = [0, 20], sizes = [8, 4], strides = [1, 1]} : vector<8x128xf32> to vector<8x4xf32>
    %66 = arith.maximumf %64, %65 : vector<8x4xf32>
    %67 = vector.extract_strided_slice %55 {offsets = [0, 24], sizes = [8, 4], strides = [1, 1]} : vector<8x128xf32> to vector<8x4xf32>
    %68 = arith.maximumf %66, %67 : vector<8x4xf32>
    %69 = vector.extract_strided_slice %55 {offsets = [0, 28], sizes = [8, 4], strides = [1, 1]} : vector<8x128xf32> to vector<8x4xf32>
    %70 = arith.maximumf %68, %69 : vector<8x4xf32>
    %71 = vector.extract_strided_slice %55 {offsets = [0, 32], sizes = [8, 4], strides = [1, 1]} : vector<8x128xf32> to vector<8x4xf32>
    %72 = arith.maximumf %70, %71 : vector<8x4xf32>
    %73 = vector.extract_strided_slice %55 {offsets = [0, 36], sizes = [8, 4], strides = [1, 1]} : vector<8x128xf32> to vector<8x4xf32>
    %74 = arith.maximumf %72, %73 : vector<8x4xf32>
    %c0_22 = arith.constant 0 : index
    %c0_23 = arith.constant 0 : index
    %75 = vector.load %arg10[%c0_22, %c0_23] : memref<4x128xf32, #tpu.memory_space<vmem>>, vector<4x128xf32>
    %cst_24 = arith.constant dense<0.000000e+00> : vector<8x128xf32>
    %76 = tpu.matmul %74, %75, %cst_24 {dimension_numbers = #tpu.dot_dimension_numbers<[1], [0], [0], [1], [0, 0, 1, 1], [], []>} : vector<8x4xf32>, vector<4x128xf32>, vector<8x128xf32> -> vector<8x128xf32>
    %77 = arith.subf %55, %76 : vector<8x128xf32>
    %78 = math.exp %77 : vector<8x128xf32>
    %c0_25 = arith.constant 0 : index
    %c0_26 = arith.constant 0 : index
    %79 = vector.load %arg11[%c0_25, %c0_26] : memref<128x4xf32, #tpu.memory_space<vmem>>, vector<128x4xf32>
    %cst_27 = arith.constant dense<0.000000e+00> : vector<8x4xf32>
    %80 = tpu.matmul %78, %79, %cst_27 {dimension_numbers = #tpu.dot_dimension_numbers<[1], [0], [0], [1], [0, 0, 1, 1], [], []>} : vector<8x128xf32>, vector<128x4xf32>, vector<8x4xf32> -> vector<8x4xf32>
    %81 = math.log %80 : vector<8x4xf32>
    %c0_28 = arith.constant 0 : index
    %c0_29 = arith.constant 0 : index
    %82 = vector.load %arg10[%c0_28, %c0_29] : memref<4x128xf32, #tpu.memory_space<vmem>>, vector<4x128xf32>
    %cst_30 = arith.constant dense<0.000000e+00> : vector<8x128xf32>
    %83 = tpu.matmul %81, %82, %cst_30 {dimension_numbers = #tpu.dot_dimension_numbers<[1], [0], [0], [1], [0, 0, 1, 1], [], []>} : vector<8x4xf32>, vector<4x128xf32>, vector<8x128xf32> -> vector<8x128xf32>
    %84 = arith.addf %76, %83 : vector<8x128xf32>
    %85 = arith.subf %55, %84 : vector<8x128xf32>
    %c0_31 = arith.constant 0 : index
    %c0_32 = arith.constant 0 : index
    %86 = vector.load %arg12[%c0_31, %c0_32] : memref<8x128xf32, #tpu.memory_space<vmem>>, vector<8x128xf32>
    tpu.vector_store %arg12[%c0_31, %c0_32], %85 {strides = array<i32>} : memref<8x128xf32, #tpu.memory_space<vmem>>, vector<8x128xf32>,
    return
  }
  func.func @transform_0(%arg0: i32) -> (i32, i32) {
    %c0_i32 = arith.constant 0 : i32
    %c0_i32_0 = arith.constant 0 : i32
    return %arg0, %c0_i32 : i32, i32
  }
  func.func @transform_1(%arg0: i32) -> (i32, i32) {
    %c0_i32 = arith.constant 0 : i32
    %c0_i32_0 = arith.constant 0 : i32
    %c0_i32_1 = arith.constant 0 : i32
    return %c0_i32, %c0_i32_0 : i32, i32
  }
  func.func @transform_2(%arg0: i32) -> (i32, i32) {
    %c0_i32 = arith.constant 0 : i32
    %c0_i32_0 = arith.constant 0 : i32
    %c0_i32_1 = arith.constant 0 : i32
    return %c0_i32, %c0_i32_0 : i32, i32
  }
  func.func @transform_3(%arg0: i32) -> (i32, i32) {
    %c0_i32 = arith.constant 0 : i32
    %c0_i32_0 = arith.constant 0 : i32
    %c0_i32_1 = arith.constant 0 : i32
    return %c0_i32, %c0_i32_0 : i32, i32
  }
  func.func @transform_4(%arg0: i32) -> (i32, i32) {
    %c0_i32 = arith.constant 0 : i32
    %c0_i32_0 = arith.constant 0 : i32
    %c0_i32_1 = arith.constant 0 : i32
    return %c0_i32, %c0_i32_0 : i32, i32
  }
  func.func @transform_5(%arg0: i32) -> (i32, i32) {
    %c0_i32 = arith.constant 0 : i32
    %c0_i32_0 = arith.constant 0 : i32
    %c0_i32_1 = arith.constant 0 : i32
    return %c0_i32, %c0_i32_0 : i32, i32
  }
  func.func @transform_6(%arg0: i32) -> (i32, i32) {
    %c0_i32 = arith.constant 0 : i32
    %c0_i32_0 = arith.constant 0 : i32
    %c0_i32_1 = arith.constant 0 : i32
    return %c0_i32, %c0_i32_0 : i32, i32
  }
  func.func @transform_7(%arg0: i32) -> (i32, i32) {
    %c0_i32 = arith.constant 0 : i32
    %c0_i32_0 = arith.constant 0 : i32
    %c0_i32_1 = arith.constant 0 : i32
    return %c0_i32, %c0_i32_0 : i32, i32
  }
  func.func @transform_8(%arg0: i32) -> (i32, i32) {
    %c0_i32 = arith.constant 0 : i32
    %c0_i32_0 = arith.constant 0 : i32
    %c0_i32_1 = arith.constant 0 : i32
    return %c0_i32, %c0_i32_0 : i32, i32
  }
  func.func @transform_9(%arg0: i32) -> (i32, i32) {
    %c0_i32 = arith.constant 0 : i32
    %c0_i32_0 = arith.constant 0 : i32
    %c0_i32_1 = arith.constant 0 : i32
    return %c0_i32, %c0_i32_0 : i32, i32
  }
  func.func @transform_10(%arg0: i32) -> (i32, i32) {
    %c0_i32 = arith.constant 0 : i32
    %c0_i32_0 = arith.constant 0 : i32
    %c0_i32_1 = arith.constant 0 : i32
    return %c0_i32, %c0_i32_0 : i32, i32
  }
  func.func @transform_11(%arg0: i32) -> (i32, i32) {
    %c0_i32 = arith.constant 0 : i32
    %c0_i32_0 = arith.constant 0 : i32
    return %arg0, %c0_i32 : i32, i32
  }
}

</mosaic_0001>

<llo_original>
// kernel: spnnet_forward.1
$region0: #{spnnet_forward.1}
  #allocation0 [shape = 'u32[]', space=smem, size = 0x4, offset = 0x4, fixed_abs, tag = 'smem constant byte address 0x4 - core index']
  #allocation1 [shape = 'u32[144,128]{1,0:T(1,128)}', space=vmem, size = 0x12000, scoped, tag = 'internal scratch']
  %s0 = inlined_call_operand.vmem [shape: f32[8,1024], index: 0, kind: input, shape index: {}]
  %s1 = inlined_call_operand.vmem [shape: bf16[1024,32], index: 1, kind: input, shape index: {}]
  %s2 = inlined_call_operand.vmem [shape: f32[1,32], index: 2, kind: input, shape index: {}]
  %s3 = inlined_call_operand.vmem [shape: bf16[32,768], index: 3, kind: input, shape index: {}]
  %s4 = inlined_call_operand.vmem [shape: f32[2,768], index: 4, kind: input, shape index: {}]
  %s5 = inlined_call_operand.vmem [shape: f32[2,768], index: 5, kind: input, shape index: {}]
  %s6 = inlined_call_operand.vmem [shape: f32[2,384], index: 6, kind: input, shape index: {}]
  %s7 = inlined_call_operand.vmem [shape: f32[384,128], index: 7, kind: input, shape index: {}]
  %s8 = inlined_call_operand.vmem [shape: f32[1,128], index: 8, kind: input, shape index: {}]
  %s9 = inlined_call_operand.vmem [shape: f32[4,128], index: 9, kind: input, shape index: {}]
  %s10 = inlined_call_operand.vmem [shape: f32[128,4], index: 10, kind: input, shape index: {}]
  %s11 = inlined_call_operand.vmem [shape: f32[8,128], index: 11, kind: output, shape index: {}]
  %s12 = sld [smem:[#allocation0]]
  $region54: #{spnnet_forward.1} parent=0
    _
  %s14 = ssub.s32 1, %s12
  %s15 = scalar_select 0, %s14, %s12
  // Predicated region
  $region2: #{spnnet_forward.1} parent=0 // pred_check
    _
  $region3: #{spnnet_forward.1} parent=0 // pred_check_branch
    %17 = sbr.rel (0) target = $region5
  $region4: #{spnnet_forward.1} parent=0 // pred_region
    _
  $region5: #{spnnet_forward.1} parent=0 // pred_fallthru
    _
  // Predicated region
  $region6: #{spnnet_forward.1} parent=0 // pred_check
    _
  $region7: #{spnnet_forward.1} parent=0 // pred_check_branch
    %19 = sbr.rel (0) target = $region9
  $region8: #{spnnet_forward.1} parent=0 // pred_region
    _
  $region9: #{spnnet_forward.1} parent=0 // pred_fallthru
    _
  // Predicated region
  $region10: #{spnnet_forward.1} parent=0 // pred_check
    _
  $region11: #{spnnet_forward.1} parent=0 // pred_check_branch
    %21 = sbr.rel (0) target = $region13
  $region12: #{spnnet_forward.1} parent=0 // pred_region
    _
  $region13: #{spnnet_forward.1} parent=0 // pred_fallthru
    _
  // Predicated region
  $region14: #{spnnet_forward.1} parent=0 // pred_check
    _
  $region15: #{spnnet_forward.1} parent=0 // pred_check_branch
    %23 = sbr.rel (0) target = $region17
  $region16: #{spnnet_forward.1} parent=0 // pred_region
    _
  $region17: #{spnnet_forward.1} parent=0 // pred_fallthru
    _
  // Predicated region
  $region18: #{spnnet_forward.1} parent=0 // pred_check
    _
  $region19: #{spnnet_forward.1} parent=0 // pred_check_branch
    %25 = sbr.rel (0) target = $region21
  $region20: #{spnnet_forward.1} parent=0 // pred_region
    _
  $region21: #{spnnet_forward.1} parent=0 // pred_fallthru
    _
  // Predicated region
  $region22: #{spnnet_forward.1} parent=0 // pred_check
    _
  $region23: #{spnnet_forward.1} parent=0 // pred_check_branch
    %27 = sbr.rel (0) target = $region25
  $region24: #{spnnet_forward.1} parent=0 // pred_region
    _
  $region25: #{spnnet_forward.1} parent=0 // pred_fallthru
    _
  // Predicated region
  $region26: #{spnnet_forward.1} parent=0 // pred_check
    _
  $region27: #{spnnet_forward.1} parent=0 // pred_check_branch
    %29 = sbr.rel (0) target = $region29
  $region28: #{spnnet_forward.1} parent=0 // pred_region
    _
  $region29: #{spnnet_forward.1} parent=0 // pred_fallthru
    _
  // Predicated region
  $region30: #{spnnet_forward.1} parent=0 // pred_check
    _
  $region31: #{spnnet_forward.1} parent=0 // pred_check_branch
    %31 = sbr.rel (0) target = $region33
  $region32: #{spnnet_forward.1} parent=0 // pred_region
    _
  $region33: #{spnnet_forward.1} parent=0 // pred_fallthru
    _
  // Predicated region
  $region34: #{spnnet_forward.1} parent=0 // pred_check
    _
  $region35: #{spnnet_forward.1} parent=0 // pred_check_branch
    %33 = sbr.rel (0) target = $region37
  $region36: #{spnnet_forward.1} parent=0 // pred_region
    _
  $region37: #{spnnet_forward.1} parent=0 // pred_fallthru
    _
  // Predicated region
  $region38: #{spnnet_forward.1} parent=0 // pred_check
    _
  $region39: #{spnnet_forward.1} parent=0 // pred_check_branch
    %35 = sbr.rel (0) target = $region41
  $region40: #{spnnet_forward.1} parent=0 // pred_region
    _
  $region41: #{spnnet_forward.1} parent=0 // pred_fallthru
    _
  // Predicated region
  $region42: #{spnnet_forward.1} parent=0 // pred_check
    _
  $region43: #{spnnet_forward.1} parent=0 // pred_check_branch
    %37 = sbr.rel (0) target = $region45
  $region44: #{spnnet_forward.1} parent=0 // pred_region
    _
  $region45: #{spnnet_forward.1} parent=0 // pred_fallthru
    _
  %v39 = vld [vmem:[%s0] sm:$0xff]
  %v40 = vld [vmem:[%s0 + $0x8] sm:$0xff]
  %v41 = vld [vmem:[%s0 + $0x10] sm:$0xff]
  %v42 = vld [vmem:[%s0 + $0x18] sm:$0xff]
  %v43 = vld [vmem:[%s0 + $0x20] sm:$0xff]
  %v44 = vld [vmem:[%s0 + $0x28] sm:$0xff]
  %v45 = vld [vmem:[%s0 + $0x30] sm:$0xff]
  %v46 = vld [vmem:[%s0 + $0x38] sm:$0xff]
  %v47 = vpack.c.bf16 %v39, %v39
  %v48 = vpack.c.bf16 %v40, %v40
  %v49 = vpack.c.bf16 %v41, %v41
  %v50 = vpack.c.bf16 %v42, %v42
  %v51 = vpack.c.bf16 %v43, %v43
  %v52 = vpack.c.bf16 %v44, %v44
  %v53 = vpack.c.bf16 %v45, %v45
  %v54 = vpack.c.bf16 %v46, %v46
  %v55 = vld [vmem:[%s1] sm:$0xf]
  %v56 = vld [vmem:[%s1 + $0x4] sm:$0xf]
  %v57 = vld [vmem:[%s1 + $0x8] sm:$0xf]
  %v58 = vld [vmem:[%s1 + $0xc] sm:$0xf]
  %v59 = vld [vmem:[%s1 + $0x10] sm:$0xf]
  %v60 = vld [vmem:[%s1 + $0x14] sm:$0xf]
  %v61 = vld [vmem:[%s1 + $0x18] sm:$0xf]
  %v62 = vld [vmem:[%s1 + $0x1c] sm:$0xf]
  %v63 = vld [vmem:[%s1 + $0x20] sm:$0xf]
  %v64 = vld [vmem:[%s1 + $0x24] sm:$0xf]
  %v65 = vld [vmem:[%s1 + $0x28] sm:$0xf]
  %v66 = vld [vmem:[%s1 + $0x2c] sm:$0xf]
  %v67 = vld [vmem:[%s1 + $0x30] sm:$0xf]
  %v68 = vld [vmem:[%s1 + $0x34] sm:$0xf]
  %v69 = vld [vmem:[%s1 + $0x38] sm:$0xf]
  %v70 = vld [vmem:[%s1 + $0x3c] sm:$0xf]
  %v71 = vld [vmem:[%s1 + $0x40] sm:$0xf]
  %v72 = vld [vmem:[%s1 + $0x44] sm:$0xf]
  %v73 = vld [vmem:[%s1 + $0x48] sm:$0xf]
  %v74 = vld [vmem:[%s1 + $0x4c] sm:$0xf]
  %v75 = vld [vmem:[%s1 + $0x50] sm:$0xf]
  %v76 = vld [vmem:[%s1 + $0x54] sm:$0xf]
  %v77 = vld [vmem:[%s1 + $0x58] sm:$0xf]
  %v78 = vld [vmem:[%s1 + $0x5c] sm:$0xf]
  %v79 = vld [vmem:[%s1 + $0x60] sm:$0xf]
  %v80 = vld [vmem:[%s1 + $0x64] sm:$0xf]
  %v81 = vld [vmem:[%s1 + $0x68] sm:$0xf]
  %v82 = vld [vmem:[%s1 + $0x6c] sm:$0xf]
  %v83 = vld [vmem:[%s1 + $0x70] sm:$0xf]
  %v84 = vld [vmem:[%s1 + $0x74] sm:$0xf]
  %v85 = vld [vmem:[%s1 + $0x78] sm:$0xf]
  %v86 = vld [vmem:[%s1 + $0x7c] sm:$0xf]
  %v87 = vld [vmem:[%s1 + $0x80] sm:$0xf]
  %v88 = vld [vmem:[%s1 + $0x84] sm:$0xf]
  %v89 = vld [vmem:[%s1 + $0x88] sm:$0xf]
  %v90 = vld [vmem:[%s1 + $0x8c] sm:$0xf]
  %v91 = vld [vmem:[%s1 + $0x90] sm:$0xf]
  %v92 = vld [vmem:[%s1 + $0x94] sm:$0xf]
  %v93 = vld [vmem:[%s1 + $0x98] sm:$0xf]
  %v94 = vld [vmem:[%s1 + $0x9c] sm:$0xf]
  %v95 = vld [vmem:[%s1 + $0xa0] sm:$0xf]
  %v96 = vld [vmem:[%s1 + $0xa4] sm:$0xf]
  %v97 = vld [vmem:[%s1 + $0xa8] sm:$0xf]
  %v98 = vld [vmem:[%s1 + $0xac] sm:$0xf]
  %v99 = vld [vmem:[%s1 + $0xb0] sm:$0xf]
  %v100 = vld [vmem:[%s1 + $0xb4] sm:$0xf]
  %v101 = vld [vmem:[%s1 + $0xb8] sm:$0xf]
  %v102 = vld [vmem:[%s1 + $0xbc] sm:$0xf]
  %v103 = vld [vmem:[%s1 + $0xc0] sm:$0xf]
  %v104 = vld [vmem:[%s1 + $0xc4] sm:$0xf]
  %v105 = vld [vmem:[%s1 + $0xc8] sm:$0xf]
  %v106 = vld [vmem:[%s1 + $0xcc] sm:$0xf]
  %v107 = vld [vmem:[%s1 + $0xd0] sm:$0xf]
  %v108 = vld [vmem:[%s1 + $0xd4] sm:$0xf]
  %v109 = vld [vmem:[%s1 + $0xd8] sm:$0xf]
  %v110 = vld [vmem:[%s1 + $0xdc] sm:$0xf]
  %v111 = vld [vmem:[%s1 + $0xe0] sm:$0xf]
  %v112 = vld [vmem:[%s1 + $0xe4] sm:$0xf]
  %v113 = vld [vmem:[%s1 + $0xe8] sm:$0xf]
  %v114 = vld [vmem:[%s1 + $0xec] sm:$0xf]
  %v115 = vld [vmem:[%s1 + $0xf0] sm:$0xf]
  %v116 = vld [vmem:[%s1 + $0xf4] sm:$0xf]
  %v117 = vld [vmem:[%s1 + $0xf8] sm:$0xf]
  %v118 = vld [vmem:[%s1 + $0xfc] sm:$0xf]
  %v119 = vld [vmem:[%s1 + $0x100] sm:$0xf]
  %v120 = vld [vmem:[%s1 + $0x104] sm:$0xf]
  %v121 = vld [vmem:[%s1 + $0x108] sm:$0xf]
  %v122 = vld [vmem:[%s1 + $0x10c] sm:$0xf]
  %v123 = vld [vmem:[%s1 + $0x110] sm:$0xf]
  %v124 = vld [vmem:[%s1 + $0x114] sm:$0xf]
  %v125 = vld [vmem:[%s1 + $0x118] sm:$0xf]
  %v126 = vld [vmem:[%s1 + $0x11c] sm:$0xf]
  %v127 = vld [vmem:[%s1 + $0x120] sm:$0xf]
  %v128 = vld [vmem:[%s1 + $0x124] sm:$0xf]
  %v129 = vld [vmem:[%s1 + $0x128] sm:$0xf]
  %v130 = vld [vmem:[%s1 + $0x12c] sm:$0xf]
  %v131 = vld [vmem:[%s1 + $0x130] sm:$0xf]
  %v132 = vld [vmem:[%s1 + $0x134] sm:$0xf]
  %v133 = vld [vmem:[%s1 + $0x138] sm:$0xf]
  %v134 = vld [vmem:[%s1 + $0x13c] sm:$0xf]
  %v135 = vld [vmem:[%s1 + $0x140] sm:$0xf]
  %v136 = vld [vmem:[%s1 + $0x144] sm:$0xf]
  %v137 = vld [vmem:[%s1 + $0x148] sm:$0xf]
  %v138 = vld [vmem:[%s1 + $0x14c] sm:$0xf]
  %v139 = vld [vmem:[%s1 + $0x150] sm:$0xf]
  %v140 = vld [vmem:[%s1 + $0x154] sm:$0xf]
  %v141 = vld [vmem:[%s1 + $0x158] sm:$0xf]
  %v142 = vld [vmem:[%s1 + $0x15c] sm:$0xf]
  %v143 = vld [vmem:[%s1 + $0x160] sm:$0xf]
  %v144 = vld [vmem:[%s1 + $0x164] sm:$0xf]
  %v145 = vld [vmem:[%s1 + $0x168] sm:$0xf]
  %v146 = vld [vmem:[%s1 + $0x16c] sm:$0xf]
  %v147 = vld [vmem:[%s1 + $0x170] sm:$0xf]
  %v148 = vld [vmem:[%s1 + $0x174] sm:$0xf]
  %v149 = vld [vmem:[%s1 + $0x178] sm:$0xf]
  %v150 = vld [vmem:[%s1 + $0x17c] sm:$0xf]
  %v151 = vld [vmem:[%s1 + $0x180] sm:$0xf]
  %v152 = vld [vmem:[%s1 + $0x184] sm:$0xf]
  %v153 = vld [vmem:[%s1 + $0x188] sm:$0xf]
  %v154 = vld [vmem:[%s1 + $0x18c] sm:$0xf]
  %v155 = vld [vmem:[%s1 + $0x190] sm:$0xf]
  %v156 = vld [vmem:[%s1 + $0x194] sm:$0xf]
  %v157 = vld [vmem:[%s1 + $0x198] sm:$0xf]
  %v158 = vld [vmem:[%s1 + $0x19c] sm:$0xf]
  %v159 = vld [vmem:[%s1 + $0x1a0] sm:$0xf]
  %v160 = vld [vmem:[%s1 + $0x1a4] sm:$0xf]
  %v161 = vld [vmem:[%s1 + $0x1a8] sm:$0xf]
  %v162 = vld [vmem:[%s1 + $0x1ac] sm:$0xf]
  %v163 = vld [vmem:[%s1 + $0x1b0] sm:$0xf]
  %v164 = vld [vmem:[%s1 + $0x1b4] sm:$0xf]
  %v165 = vld [vmem:[%s1 + $0x1b8] sm:$0xf]
  %v166 = vld [vmem:[%s1 + $0x1bc] sm:$0xf]
  %v167 = vld [vmem:[%s1 + $0x1c0] sm:$0xf]
  %v168 = vld [vmem:[%s1 + $0x1c4] sm:$0xf]
  %v169 = vld [vmem:[%s1 + $0x1c8] sm:$0xf]
  %v170 = vld [vmem:[%s1 + $0x1cc] sm:$0xf]
  %v171 = vld [vmem:[%s1 + $0x1d0] sm:$0xf]
  %v172 = vld [vmem:[%s1 + $0x1d4] sm:$0xf]
  %v173 = vld [vmem:[%s1 + $0x1d8] sm:$0xf]
  %v174 = vld [vmem:[%s1 + $0x1dc] sm:$0xf]
  %v175 = vld [vmem:[%s1 + $0x1e0] sm:$0xf]
  %v176 = vld [vmem:[%s1 + $0x1e4] sm:$0xf]
  %v177 = vld [vmem:[%s1 + $0x1e8] sm:$0xf]
  %v178 = vld [vmem:[%s1 + $0x1ec] sm:$0xf]
  %v179 = vld [vmem:[%s1 + $0x1f0] sm:$0xf]
  %v180 = vld [vmem:[%s1 + $0x1f4] sm:$0xf]
  %v181 = vld [vmem:[%s1 + $0x1f8] sm:$0xf]
  %v182 = vld [vmem:[%s1 + $0x1fc] sm:$0xf]
  %v183 = vld [vmem:[%s2] sm:$0x1]
  %v185 = vlaneseq
  %v186 = vshrl.u32 %v185, 7
  %v187 = vsub.s32 0, %v186
  %v188 = vrot.slane %v183, %v187
  %v318 = vunpack.c.l.b16 %v55
  %v319 = vunpack.c.l.b16 %v56
  %v320 = vunpack.c.l.b16 %v57
  %v321 = vunpack.c.l.b16 %v58
  %v322 = vunpack.c.l.b16 %v59
  %v323 = vunpack.c.l.b16 %v60
  %v324 = vunpack.c.l.b16 %v61
  %v325 = vunpack.c.l.b16 %v62
  %v326 = vunpack.c.l.b16 %v63
  %v327 = vunpack.c.l.b16 %v64
  %v328 = vunpack.c.l.b16 %v65
  %v329 = vunpack.c.l.b16 %v66
  %v330 = vunpack.c.l.b16 %v67
  %v331 = vunpack.c.l.b16 %v68
  %v332 = vunpack.c.l.b16 %v69
  %v333 = vunpack.c.l.b16 %v70
  %v334 = vunpack.c.l.b16 %v71
  %v335 = vunpack.c.l.b16 %v72
  %v336 = vunpack.c.l.b16 %v73
  %v337 = vunpack.c.l.b16 %v74
  %v338 = vunpack.c.l.b16 %v75
  %v339 = vunpack.c.l.b16 %v76
  %v340 = vunpack.c.l.b16 %v77
  %v341 = vunpack.c.l.b16 %v78
  %v342 = vunpack.c.l.b16 %v79
  %v343 = vunpack.c.l.b16 %v80
  %v344 = vunpack.c.l.b16 %v81
  %v345 = vunpack.c.l.b16 %v82
  %v346 = vunpack.c.l.b16 %v83
  %v347 = vunpack.c.l.b16 %v84
  %v348 = vunpack.c.l.b16 %v85
  %v349 = vunpack.c.l.b16 %v86
  %v350 = vunpack.c.l.b16 %v87
  %v351 = vunpack.c.l.b16 %v88
  %v352 = vunpack.c.l.b16 %v89
  %v353 = vunpack.c.l.b16 %v90
  %v354 = vunpack.c.l.b16 %v91
  %v355 = vunpack.c.l.b16 %v92
  %v356 = vunpack.c.l.b16 %v93
  %v357 = vunpack.c.l.b16 %v94
  %v358 = vunpack.c.l.b16 %v95
  %v359 = vunpack.c.l.b16 %v96
  %v360 = vunpack.c.l.b16 %v97
  %v361 = vunpack.c.l.b16 %v98
  %v362 = vunpack.c.l.b16 %v99
  %v363 = vunpack.c.l.b16 %v100
  %v364 = vunpack.c.l.b16 %v101
  %v365 = vunpack.c.l.b16 %v102
  %v366 = vunpack.c.l.b16 %v103
  %v367 = vunpack.c.l.b16 %v104
  %v368 = vunpack.c.l.b16 %v105
  %v369 = vunpack.c.l.b16 %v106
  %v370 = vunpack.c.l.b16 %v107
  %v371 = vunpack.c.l.b16 %v108
  %v372 = vunpack.c.l.b16 %v109
  %v373 = vunpack.c.l.b16 %v110
  %v374 = vunpack.c.l.b16 %v111
  %v375 = vunpack.c.l.b16 %v112
  %v376 = vunpack.c.l.b16 %v113
  %v377 = vunpack.c.l.b16 %v114
  %v378 = vunpack.c.l.b16 %v115
  %v379 = vunpack.c.l.b16 %v116
  %v380 = vunpack.c.l.b16 %v117
  %v381 = vunpack.c.l.b16 %v118
  %v382 = vunpack.c.l.b16 %v119
  %v383 = vunpack.c.l.b16 %v120
  %v384 = vunpack.c.l.b16 %v121
  %v385 = vunpack.c.l.b16 %v122
  %v386 = vunpack.c.l.b16 %v123
  %v387 = vunpack.c.l.b16 %v124
  %v388 = vunpack.c.l.b16 %v125
  %v389 = vunpack.c.l.b16 %v126
  %v390 = vunpack.c.l.b16 %v127
  %v391 = vunpack.c.l.b16 %v128
  %v392 = vunpack.c.l.b16 %v129
  %v393 = vunpack.c.l.b16 %v130
  %v394 = vunpack.c.l.b16 %v131
  %v395 = vunpack.c.l.b16 %v132
  %v396 = vunpack.c.l.b16 %v133
  %v397 = vunpack.c.l.b16 %v134
  %v398 = vunpack.c.l.b16 %v135
  %v399 = vunpack.c.l.b16 %v136
  %v400 = vunpack.c.l.b16 %v137
  %v401 = vunpack.c.l.b16 %v138
  %v402 = vunpack.c.l.b16 %v139
  %v403 = vunpack.c.l.b16 %v140
  %v404 = vunpack.c.l.b16 %v141
  %v405 = vunpack.c.l.b16 %v142
  %v406 = vunpack.c.l.b16 %v143
  %v407 = vunpack.c.l.b16 %v144
  %v408 = vunpack.c.l.b16 %v145
  %v409 = vunpack.c.l.b16 %v146
  %v410 = vunpack.c.l.b16 %v147
  %v411 = vunpack.c.l.b16 %v148
  %v412 = vunpack.c.l.b16 %v149
  %v413 = vunpack.c.l.b16 %v150
  %v414 = vunpack.c.l.b16 %v151
  %v415 = vunpack.c.l.b16 %v152
  %v416 = vunpack.c.l.b16 %v153
  %v417 = vunpack.c.l.b16 %v154
  %v418 = vunpack.c.l.b16 %v155
  %v419 = vunpack.c.l.b16 %v156
  %v420 = vunpack.c.l.b16 %v157
  %v421 = vunpack.c.l.b16 %v158
  %v422 = vunpack.c.l.b16 %v159
  %v423 = vunpack.c.l.b16 %v160
  %v424 = vunpack.c.l.b16 %v161
  %v425 = vunpack.c.l.b16 %v162
  %v426 = vunpack.c.l.b16 %v163
  %v427 = vunpack.c.l.b16 %v164
  %v428 = vunpack.c.l.b16 %v165
  %v429 = vunpack.c.l.b16 %v166
  %v430 = vunpack.c.l.b16 %v167
  %v431 = vunpack.c.l.b16 %v168
  %v432 = vunpack.c.l.b16 %v169
  %v433 = vunpack.c.l.b16 %v170
  %v434 = vunpack.c.l.b16 %v171
  %v435 = vunpack.c.l.b16 %v172
  %v436 = vunpack.c.l.b16 %v173
  %v437 = vunpack.c.l.b16 %v174
  %v438 = vunpack.c.l.b16 %v175
  %v439 = vunpack.c.l.b16 %v176
  %v440 = vunpack.c.l.b16 %v177
  %v441 = vunpack.c.l.b16 %v178
  %v442 = vunpack.c.l.b16 %v179
  %v443 = vunpack.c.l.b16 %v180
  %v444 = vunpack.c.l.b16 %v181
  %v445 = vunpack.c.l.b16 %v182
  %v446 = vpack.c.b16 %v319, %v318
  %v447 = vpack.c.b16 %v321, %v320
  %v448 = vpack.c.b16 %v323, %v322
  %v449 = vpack.c.b16 %v325, %v324
  %v450 = vpack.c.b16 %v327, %v326
  %v451 = vpack.c.b16 %v329, %v328
  %v452 = vpack.c.b16 %v331, %v330
  %v453 = vpack.c.b16 %v333, %v332
  %v454 = vpack.c.b16 %v335, %v334
  %v455 = vpack.c.b16 %v337, %v336
  %v456 = vpack.c.b16 %v339, %v338
  %v457 = vpack.c.b16 %v341, %v340
  %v458 = vpack.c.b16 %v343, %v342
  %v459 = vpack.c.b16 %v345, %v344
  %v460 = vpack.c.b16 %v347, %v346
  %v461 = vpack.c.b16 %v349, %v348
  %v462 = vpack.c.b16 %v351, %v350
  %v463 = vpack.c.b16 %v353, %v352
  %v464 = vpack.c.b16 %v355, %v354
  %v465 = vpack.c.b16 %v357, %v356
  %v466 = vpack.c.b16 %v359, %v358
  %v467 = vpack.c.b16 %v361, %v360
  %v468 = vpack.c.b16 %v363, %v362
  %v469 = vpack.c.b16 %v365, %v364
  %v470 = vpack.c.b16 %v367, %v366
  %v471 = vpack.c.b16 %v369, %v368
  %v472 = vpack.c.b16 %v371, %v370
  %v473 = vpack.c.b16 %v373, %v372
  %v474 = vpack.c.b16 %v375, %v374
  %v475 = vpack.c.b16 %v377, %v376
  %v476 = vpack.c.b16 %v379, %v378
  %v477 = vpack.c.b16 %v381, %v380
  %v478 = vpack.c.b16 %v383, %v382
  %v479 = vpack.c.b16 %v385, %v384
  %v480 = vpack.c.b16 %v387, %v386
  %v481 = vpack.c.b16 %v389, %v388
  %v482 = vpack.c.b16 %v391, %v390
  %v483 = vpack.c.b16 %v393, %v392
  %v484 = vpack.c.b16 %v395, %v394
  %v485 = vpack.c.b16 %v397, %v396
  %v486 = vpack.c.b16 %v399, %v398
  %v487 = vpack.c.b16 %v401, %v400
  %v488 = vpack.c.b16 %v403, %v402
  %v489 = vpack.c.b16 %v405, %v404
  %v490 = vpack.c.b16 %v407, %v406
  %v491 = vpack.c.b16 %v409, %v408
  %v492 = vpack.c.b16 %v411, %v410
  %v493 = vpack.c.b16 %v413, %v412
  %v494 = vpack.c.b16 %v415, %v414
  %v495 = vpack.c.b16 %v417, %v416
  %v496 = vpack.c.b16 %v419, %v418
  %v497 = vpack.c.b16 %v421, %v420
  %v498 = vpack.c.b16 %v423, %v422
  %v499 = vpack.c.b16 %v425, %v424
  %v500 = vpack.c.b16 %v427, %v426
  %v501 = vpack.c.b16 %v429, %v428
  %v502 = vpack.c.b16 %v431, %v430
  %v503 = vpack.c.b16 %v433, %v432
  %v504 = vpack.c.b16 %v435, %v434
  %v505 = vpack.c.b16 %v437, %v436
  %v506 = vpack.c.b16 %v439, %v438
  %v507 = vpack.c.b16 %v441, %v440
  %v508 = vpack.c.b16 %v443, %v442
  %v509 = vpack.c.b16 %v445, %v444
  %574 = vmatprep.subr.bf16.mxu0 0
  %575 = vmatpush1.bf16.msra.mxu0 %v446
  %576 = vmatprep.subr.bf16.mxu0 0
  %577 = vmatpush1.bf16.msra.mxu0 %v447
  %578 = vmatprep.subr.bf16.mxu0 0
  %579 = vmatpush1.bf16.msra.mxu0 %v448
  %580 = vmatprep.subr.bf16.mxu0 0
  %581 = vmatpush1.bf16.msra.mxu0 %v449
  %582 = vmatprep.subr.bf16.mxu0 0
  %583 = vmatpush1.bf16.msra.mxu0 %v450
  %584 = vmatprep.subr.bf16.mxu0 0
  %585 = vmatpush1.bf16.msra.mxu0 %v451
  %586 = vmatprep.subr.bf16.mxu0 0
  %587 = vmatpush1.bf16.msra.mxu0 %v452
  %588 = vmatprep.subr.bf16.mxu0 0
  %589 = vmatpush1.bf16.msra.mxu0 %v453
  %590 = vmatprep.subr.bf16.mxu0 0
  %591 = vmatpush1.bf16.msra.mxu0 %v454
  %592 = vmatprep.subr.bf16.mxu0 0
  %593 = vmatpush1.bf16.msra.mxu0 %v455
  %594 = vmatprep.subr.bf16.mxu0 0
  %595 = vmatpush1.bf16.msra.mxu0 %v456
  %596 = vmatprep.subr.bf16.mxu0 0
  %597 = vmatpush1.bf16.msra.mxu0 %v457
  %598 = vmatprep.subr.bf16.mxu0 0
  %599 = vmatpush1.bf16.msra.mxu0 %v458
  %600 = vmatprep.subr.bf16.mxu0 0
  %601 = vmatpush1.bf16.msra.mxu0 %v459
  %602 = vmatprep.subr.bf16.mxu0 0
  %603 = vmatpush1.bf16.msra.mxu0 %v460
  %604 = vmatprep.subr.bf16.mxu0 0
  %605 = vmatpush1.bf16.msra.mxu0 %v461
  %606 = vmatprep.mubr.bf16.mxu0 %v48
  %607 = vmatmul.mubr.bf16.gmra.mrb[0].mxu0 %v47
  %v608 = vpop.f32.mrb[0].mxu0
  %v609 = vadd.f32 %v188, %v608
  %v610 = vpop.f32.mrb[0].mxu0
  %v611 = vpop.f32.mrb[0].mxu0
  %v612 = vpop.f32.mrb[0].mxu0
  %613 = vdwg.mxu0
  %614 = vmatprep.subr.bf16.mxu0 0
  %615 = vmatpush1.bf16.msra.mxu0 %v462
  %616 = vmatprep.subr.bf16.mxu0 0
  %617 = vmatpush1.bf16.msra.mxu0 %v463
  %618 = vmatprep.subr.bf16.mxu0 0
  %619 = vmatpush1.bf16.msra.mxu0 %v464
  %620 = vmatprep.subr.bf16.mxu0 0
  %621 = vmatpush1.bf16.msra.mxu0 %v465
  %622 = vmatprep.subr.bf16.mxu0 0
  %623 = vmatpush1.bf16.msra.mxu0 %v466
  %624 = vmatprep.subr.bf16.mxu0 0
  %625 = vmatpush1.bf16.msra.mxu0 %v467
  %626 = vmatprep.subr.bf16.mxu0 0
  %627 = vmatpush1.bf16.msra.mxu0 %v468
  %628 = vmatprep.subr.bf16.mxu0 0
  %629 = vmatpush1.bf16.msra.mxu0 %v469
  %630 = vmatprep.subr.bf16.mxu0 0
  %631 = vmatpush1.bf16.msra.mxu0 %v470
  %632 = vmatprep.subr.bf16.mxu0 0
  %633 = vmatpush1.bf16.msra.mxu0 %v471
  %634 = vmatprep.subr.bf16.mxu0 0
  %635 = vmatpush1.bf16.msra.mxu0 %v472
  %636 = vmatprep.subr.bf16.mxu0 0
  %637 = vmatpush1.bf16.msra.mxu0 %v473
  %638 = vmatprep.subr.bf16.mxu0 0
  %639 = vmatpush1.bf16.msra.mxu0 %v474
  %640 = vmatprep.subr.bf16.mxu0 0
  %641 = vmatpush1.bf16.msra.mxu0 %v475
  %642 = vmatprep.subr.bf16.mxu0 0
  %643 = vmatpush1.bf16.msra.mxu0 %v476
  %644 = vmatprep.subr.bf16.mxu0 0
  %645 = vmatpush1.bf16.msra.mxu0 %v477
  %646 = vmatprep.mubr.bf16.mxu0 %v50
  %647 = vmatmul.mubr.bf16.gmra.mrb[0].mxu0 %v49
  %v648 = vpop.f32.mrb[0].mxu0
  %v649 = vadd.f32 %v609, %v648
  %v650 = vpop.f32.mrb[0].mxu0
  %v651 = vpop.f32.mrb[0].mxu0
  %v652 = vpop.f32.mrb[0].mxu0
  %653 = vdwg.mxu0
  %654 = vmatprep.subr.bf16.mxu0 0
  %655 = vmatpush1.bf16.msra.mxu0 %v478
  %656 = vmatprep.subr.bf16.mxu0 0
  %657 = vmatpush1.bf16.msra.mxu0 %v479
  %658 = vmatprep.subr.bf16.mxu0 0
  %659 = vmatpush1.bf16.msra.mxu0 %v480
  %660 = vmatprep.subr.bf16.mxu0 0
  %661 = vmatpush1.bf16.msra.mxu0 %v481
  %662 = vmatprep.subr.bf16.mxu0 0
  %663 = vmatpush1.bf16.msra.mxu0 %v482
  %664 = vmatprep.subr.bf16.mxu0 0
  %665 = vmatpush1.bf16.msra.mxu0 %v483
  %666 = vmatprep.subr.bf16.mxu0 0
  %667 = vmatpush1.bf16.msra.mxu0 %v484
  %668 = vmatprep.subr.bf16.mxu0 0
  %669 = vmatpush1.bf16.msra.mxu0 %v485
  %670 = vmatprep.subr.bf16.mxu0 0
  %671 = vmatpush1.bf16.msra.mxu0 %v486
  %672 = vmatprep.subr.bf16.mxu0 0
  %673 = vmatpush1.bf16.msra.mxu0 %v487
  %674 = vmatprep.subr.bf16.mxu0 0
  %675 = vmatpush1.bf16.msra.mxu0 %v488
  %676 = vmatprep.subr.bf16.mxu0 0
  %677 = vmatpush1.bf16.msra.mxu0 %v489
  %678 = vmatprep.subr.bf16.mxu0 0
  %679 = vmatpush1.bf16.msra.mxu0 %v490
  %680 = vmatprep.subr.bf16.mxu0 0
  %681 = vmatpush1.bf16.msra.mxu0 %v491
  %682 = vmatprep.subr.bf16.mxu0 0
  %683 = vmatpush1.bf16.msra.mxu0 %v492
  %684 = vmatprep.subr.bf16.mxu0 0
  %685 = vmatpush1.bf16.msra.mxu0 %v493
  %686 = vmatprep.mubr.bf16.mxu0 %v52
  %687 = vmatmul.mubr.bf16.gmra.mrb[0].mxu0 %v51
  %v688 = vpop.f32.mrb[0].mxu0
  %v689 = vadd.f32 %v649, %v688
  %v690 = vpop.f32.mrb[0].mxu0
  %v691 = vpop.f32.mrb[0].mxu0
  %v692 = vpop.f32.mrb[0].mxu0
  %693 = vdwg.mxu0
  %694 = vmatprep.subr.bf16.mxu0 0
  %695 = vmatpush1.bf16.msra.mxu0 %v494
  %696 = vmatprep.subr.bf16.mxu0 0
  %697 = vmatpush1.bf16.msra.mxu0 %v495
  %698 = vmatprep.subr.bf16.mxu0 0
  %699 = vmatpush1.bf16.msra.mxu0 %v496
  %700 = vmatprep.subr.bf16.mxu0 0
  %701 = vmatpush1.bf16.msra.mxu0 %v497
  %702 = vmatprep.subr.bf16.mxu0 0
  %703 = vmatpush1.bf16.msra.mxu0 %v498
  %704 = vmatprep.subr.bf16.mxu0 0
  %705 = vmatpush1.bf16.msra.mxu0 %v499
  %706 = vmatprep.subr.bf16.mxu0 0
  %707 = vmatpush1.bf16.msra.mxu0 %v500
  %708 = vmatprep.subr.bf16.mxu0 0
  %709 = vmatpush1.bf16.msra.mxu0 %v501
  %710 = vmatprep.subr.bf16.mxu0 0
  %711 = vmatpush1.bf16.msra.mxu0 %v502
  %712 = vmatprep.subr.bf16.mxu0 0
  %713 = vmatpush1.bf16.msra.mxu0 %v503
  %714 = vmatprep.subr.bf16.mxu0 0
  %715 = vmatpush1.bf16.msra.mxu0 %v504
  %716 = vmatprep.subr.bf16.mxu0 0
  %717 = vmatpush1.bf16.msra.mxu0 %v505
  %718 = vmatprep.subr.bf16.mxu0 0
  %719 = vmatpush1.bf16.msra.mxu0 %v506
  %720 = vmatprep.subr.bf16.mxu0 0
  %721 = vmatpush1.bf16.msra.mxu0 %v507
  %722 = vmatprep.subr.bf16.mxu0 0
  %723 = vmatpush1.bf16.msra.mxu0 %v508
  %724 = vmatprep.subr.bf16.mxu0 0
  %725 = vmatpush1.bf16.msra.mxu0 %v509
  %726 = vmatprep.mubr.bf16.mxu0 %v54
  %727 = vmatmul.mubr.bf16.gmra.mrb[0].mxu0 %v53
  %v728 = vpop.f32.mrb[0].mxu0
  %v729 = vadd.f32 %v689, %v728
  %v730 = vpop.f32.mrb[0].mxu0
  %v731 = vpop.f32.mrb[0].mxu0
  %v732 = vpop.f32.mrb[0].mxu0
  %733 = vdwg.mxu0
  %v734 = vmax.f32 %v729, 0.0
  %v735 = vpack.c.bf16 %v734, %v734
  %v736 = vld [vmem:[%s3] sm:$0xff]
  %v737 = vld [vmem:[%s3 + $0x8] sm:$0xff]
  %v738 = vld [vmem:[%s3 + $0x10] sm:$0xff]
  %v739 = vld [vmem:[%s3 + $0x18] sm:$0xff]
  %v740 = vld [vmem:[%s3 + $0x20] sm:$0xff]
  %v741 = vld [vmem:[%s3 + $0x28] sm:$0xff]
  %v742 = vld [vmem:[%s3 + $0x30] sm:$0xff]
  %v743 = vld [vmem:[%s3 + $0x38] sm:$0xff]
  %v744 = vld [vmem:[%s3 + $0x40] sm:$0xff]
  %v745 = vld [vmem:[%s3 + $0x48] sm:$0xff]
  %v746 = vld [vmem:[%s3 + $0x50] sm:$0xff]
  %v747 = vld [vmem:[%s3 + $0x58] sm:$0xff]
  %v760 = vunpack.c.l.b16 %v736
  %v761 = vunpack.c.h.b16 %v736
  %v762 = vunpack.c.l.b16 %v737
  %v763 = vunpack.c.h.b16 %v737
  %v764 = vunpack.c.l.b16 %v738
  %v765 = vunpack.c.h.b16 %v738
  %v766 = vunpack.c.l.b16 %v739
  %v767 = vunpack.c.h.b16 %v739
  %v768 = vunpack.c.l.b16 %v740
  %v769 = vunpack.c.h.b16 %v740
  %v770 = vunpack.c.l.b16 %v741
  %v771 = vunpack.c.h.b16 %v741
  %v772 = vunpack.c.l.b16 %v742
  %v773 = vunpack.c.h.b16 %v742
  %v774 = vunpack.c.l.b16 %v743
  %v775 = vunpack.c.h.b16 %v743
  %v776 = vunpack.c.l.b16 %v744
  %v777 = vunpack.c.h.b16 %v744
  %v778 = vunpack.c.l.b16 %v745
  %v779 = vunpack.c.h.b16 %v745
  %v780 = vunpack.c.l.b16 %v746
  %v781 = vunpack.c.h.b16 %v746
  %v782 = vunpack.c.l.b16 %v747
  %v783 = vunpack.c.h.b16 %v747
  %v784 = vpack.c.b16 %v766, %v760
  %v785 = vpack.c.b16 %v767, %v761
  %v786 = vpack.c.b16 %v768, %v762
  %v787 = vpack.c.b16 %v769, %v763
  %v788 = vpack.c.b16 %v770, %v764
  %v789 = vpack.c.b16 %v771, %v765
  %v790 = vpack.c.b16 %v778, %v772
  %v791 = vpack.c.b16 %v779, %v773
  %v792 = vpack.c.b16 %v780, %v774
  %v793 = vpack.c.b16 %v781, %v775
  %v794 = vpack.c.b16 %v782, %v776
  %v795 = vpack.c.b16 %v783, %v777
  %vm808 = vcmask 261120
  %v810 = vsel %vm808, %v735, 0
  %812 = vmatprep.subr.bf16.mxu0 %v785
  %813 = vmatpush1.bf16.msra.mxu0 %v784
  %814 = vmatprep.subr.bf16.mxu0 %v791
  %815 = vmatpush1.bf16.msra.mxu0 %v790
  %816 = vmatprep.subr.bf16.mxu0 0
  %817 = vmatpush1.bf16.msra.mxu0 0
  %818 = vmatprep.subr.bf16.mxu0 0
  %819 = vmatpush1.bf16.msra.mxu0 0
  %820 = vmatprep.subr.bf16.mxu0 0
  %821 = vmatpush1.bf16.msra.mxu0 0
  %822 = vmatprep.subr.bf16.mxu0 0
  %823 = vmatpush1.bf16.msra.mxu0 0
  %824 = vmatprep.subr.bf16.mxu0 0
  %825 = vmatpush1.bf16.msra.mxu0 0
  %826 = vmatprep.subr.bf16.mxu0 0
  %827 = vmatpush1.bf16.msra.mxu0 0
  %828 = vmatprep.subr.bf16.mxu0 0
  %829 = vmatpush1.bf16.msra.mxu0 0
  %830 = vmatprep.subr.bf16.mxu0 0
  %831 = vmatpush1.bf16.msra.mxu0 0
  %832 = vmatprep.subr.bf16.mxu0 0
  %833 = vmatpush1.bf16.msra.mxu0 0
  %834 = vmatprep.subr.bf16.mxu0 0
  %835 = vmatpush1.bf16.msra.mxu0 0
  %836 = vmatprep.subr.bf16.mxu0 0
  %837 = vmatpush1.bf16.msra.mxu0 0
  %838 = vmatprep.subr.bf16.mxu0 0
  %839 = vmatpush1.bf16.msra.mxu0 0
  %840 = vmatprep.subr.bf16.mxu0 0
  %841 = vmatpush1.bf16.msra.mxu0 0
  %842 = vmatprep.subr.bf16.mxu0 0
  %843 = vmatpush1.bf16.msra.mxu0 0
  %844 = vmatprep.mubr.bf16.mxu0 0
  %845 = vmatmul.mubr.bf16.gmra.mrb[0].mxu0 %v810
  %v846 = vpop.f32.mrb[0].mxu0
  %v847 = vadd.f32 0.0, %v846
  %v848 = vpop.f32.mrb[0].mxu0
  %v849 = vadd.f32 0.0, %v848
  %v850 = vpop.f32.mrb[0].mxu0
  %v851 = vpop.f32.mrb[0].mxu0
  %852 = vdwg.mxu0
  %853 = vmatprep.subr.bf16.mxu0 %v787
  %854 = vmatpush1.bf16.msra.mxu0 %v786
  %855 = vmatprep.subr.bf16.mxu0 %v793
  %856 = vmatpush1.bf16.msra.mxu0 %v792
  %857 = vmatprep.subr.bf16.mxu0 0
  %858 = vmatpush1.bf16.msra.mxu0 0
  %859 = vmatprep.subr.bf16.mxu0 0
  %860 = vmatpush1.bf16.msra.mxu0 0
  %861 = vmatprep.subr.bf16.mxu0 0
  %862 = vmatpush1.bf16.msra.mxu0 0
  %863 = vmatprep.subr.bf16.mxu0 0
  %864 = vmatpush1.bf16.msra.mxu0 0
  %865 = vmatprep.subr.bf16.mxu0 0
  %866 = vmatpush1.bf16.msra.mxu0 0
  %867 = vmatprep.subr.bf16.mxu0 0
  %868 = vmatpush1.bf16.msra.mxu0 0
  %869 = vmatprep.subr.bf16.mxu0 0
  %870 = vmatpush1.bf16.msra.mxu0 0
  %871 = vmatprep.subr.bf16.mxu0 0
  %872 = vmatpush1.bf16.msra.mxu0 0
  %873 = vmatprep.subr.bf16.mxu0 0
  %874 = vmatpush1.bf16.msra.mxu0 0
  %875 = vmatprep.subr.bf16.mxu0 0
  %876 = vmatpush1.bf16.msra.mxu0 0
  %877 = vmatprep.subr.bf16.mxu0 0
  %878 = vmatpush1.bf16.msra.mxu0 0
  %879 = vmatprep.subr.bf16.mxu0 0
  %880 = vmatpush1.bf16.msra.mxu0 0
  %881 = vmatprep.subr.bf16.mxu0 0
  %882 = vmatpush1.bf16.msra.mxu0 0
  %883 = vmatprep.subr.bf16.mxu0 0
  %884 = vmatpush1.bf16.msra.mxu0 0
  %885 = vmatprep.mubr.bf16.mxu0 0
  %886 = vmatmul.mubr.bf16.gmra.mrb[0].mxu0 %v810
  %v887 = vpop.f32.mrb[0].mxu0
  %v888 = vadd.f32 0.0, %v887
  %v889 = vpop.f32.mrb[0].mxu0
  %v890 = vadd.f32 0.0, %v889
  %v891 = vpop.f32.mrb[0].mxu0
  %v892 = vpop.f32.mrb[0].mxu0
  %893 = vdwg.mxu0
  %894 = vmatprep.subr.bf16.mxu0 %v789
  %895 = vmatpush1.bf16.msra.mxu0 %v788
  %896 = vmatprep.subr.bf16.mxu0 %v795
  %897 = vmatpush1.bf16.msra.mxu0 %v794
  %898 = vmatprep.subr.bf16.mxu0 0
  %899 = vmatpush1.bf16.msra.mxu0 0
  %900 = vmatprep.subr.bf16.mxu0 0
  %901 = vmatpush1.bf16.msra.mxu0 0
  %902 = vmatprep.subr.bf16.mxu0 0
  %903 = vmatpush1.bf16.msra.mxu0 0
  %904 = vmatprep.subr.bf16.mxu0 0
  %905 = vmatpush1.bf16.msra.mxu0 0
  %906 = vmatprep.subr.bf16.mxu0 0
  %907 = vmatpush1.bf16.msra.mxu0 0
  %908 = vmatprep.subr.bf16.mxu0 0
  %909 = vmatpush1.bf16.msra.mxu0 0
  %910 = vmatprep.subr.bf16.mxu0 0
  %911 = vmatpush1.bf16.msra.mxu0 0
  %912 = vmatprep.subr.bf16.mxu0 0
  %913 = vmatpush1.bf16.msra.mxu0 0
  %914 = vmatprep.subr.bf16.mxu0 0
  %915 = vmatpush1.bf16.msra.mxu0 0
  %916 = vmatprep.subr.bf16.mxu0 0
  %917 = vmatpush1.bf16.msra.mxu0 0
  %918 = vmatprep.subr.bf16.mxu0 0
  %919 = vmatpush1.bf16.msra.mxu0 0
  %920 = vmatprep.subr.bf16.mxu0 0
  %921 = vmatpush1.bf16.msra.mxu0 0
  %922 = vmatprep.subr.bf16.mxu0 0
  %923 = vmatpush1.bf16.msra.mxu0 0
  %924 = vmatprep.subr.bf16.mxu0 0
  %925 = vmatpush1.bf16.msra.mxu0 0
  %926 = vmatprep.mubr.bf16.mxu0 0
  %927 = vmatmul.mubr.bf16.gmra.mrb[0].mxu0 %v810
  %v928 = vpop.f32.mrb[0].mxu0
  %v929 = vadd.f32 0.0, %v928
  %v930 = vpop.f32.mrb[0].mxu0
  %v931 = vadd.f32 0.0, %v930
  %v932 = vpop.f32.mrb[0].mxu0
  %v933 = vpop.f32.mrb[0].mxu0
  %934 = vdwg.mxu0
  %v935 = vld [vmem:[%s4] sm:$0xff]
  %v936 = vld [vmem:[%s4 + $0x8] sm:$0xf]
  %v937 = vld [vmem:[%s5] sm:$0xff]
  %v938 = vld [vmem:[%s5 + $0x8] sm:$0xf]
  %v939 = vld [vmem:[%s6] sm:$0x3f]
  %v942 = vlaneseq
  %v943 = vshrl.u32 %v942, 7
  %v944 = vsub.s32 0, %v943
  %v945 = vrot.slane %v935, %v944
  %v946 = vlaneseq
  %v947 = vshrl.u32 %v946, 7
  %v948 = vsub.s32 2, %v947
  %v949 = vrot.slane %v935, %v948
  %v950 = vlaneseq
  %v951 = vshrl.u32 %v950, 7
  %v952 = vsub.s32 4, %v951
  %v953 = vrot.slane %v935, %v952
  %v954 = vlaneseq
  %v955 = vshrl.u32 %v954, 7
  %v956 = vsub.s32 6, %v955
  %v957 = vrot.slane %v935, %v956
  %v958 = vlaneseq
  %v959 = vshrl.u32 %v958, 7
  %v960 = vsub.s32 0, %v959
  %v961 = vrot.slane %v936, %v960
  %v962 = vlaneseq
  %v963 = vshrl.u32 %v962, 7
  %v964 = vsub.s32 2, %v963
  %v965 = vrot.slane %v936, %v964
  %v972 = vlaneseq
  %v973 = vshrl.u32 %v972, 7
  %v974 = vsub.s32 0, %v973
  %v975 = vrot.slane %v945, %v974
  %v976 = vlaneseq
  %v977 = vshrl.u32 %v976, 7
  %v978 = vsub.s32 0, %v977
  %v979 = vrot.slane %v949, %v978
  %v980 = vlaneseq
  %v981 = vshrl.u32 %v980, 7
  %v982 = vsub.s32 0, %v981
  %v983 = vrot.slane %v953, %v982
  %v984 = vlaneseq
  %v985 = vshrl.u32 %v984, 7
  %v986 = vsub.s32 0, %v985
  %v987 = vrot.slane %v957, %v986
  %v988 = vlaneseq
  %v989 = vshrl.u32 %v988, 7
  %v990 = vsub.s32 0, %v989
  %v991 = vrot.slane %v961, %v990
  %v992 = vlaneseq
  %v993 = vshrl.u32 %v992, 7
  %v994 = vsub.s32 0, %v993
  %v995 = vrot.slane %v965, %v994
  %v996 = vsub.f32 %v847, %v975
  %v997 = vsub.f32 %v849, %v979
  %v998 = vsub.f32 %v888, %v983
  %v999 = vsub.f32 %v890, %v987
  %v1000 = vsub.f32 %v929, %v991
  %v1001 = vsub.f32 %v931, %v995
  %v1004 = vlaneseq
  %v1005 = vshrl.u32 %v1004, 7
  %v1006 = vsub.s32 0, %v1005
  %v1007 = vrot.slane %v937, %v1006
  %v1008 = vlaneseq
  %v1009 = vshrl.u32 %v1008, 7
  %v1010 = vsub.s32 2, %v1009
  %v1011 = vrot.slane %v937, %v1010
  %v1012 = vlaneseq
  %v1013 = vshrl.u32 %v1012, 7
  %v1014 = vsub.s32 4, %v1013
  %v1015 = vrot.slane %v937, %v1014
  %v1016 = vlaneseq
  %v1017 = vshrl.u32 %v1016, 7
  %v1018 = vsub.s32 6, %v1017
  %v1019 = vrot.slane %v937, %v1018
  %v1020 = vlaneseq
  %v1021 = vshrl.u32 %v1020, 7
  %v1022 = vsub.s32 0, %v1021
  %v1023 = vrot.slane %v938, %v1022
  %v1024 = vlaneseq
  %v1025 = vshrl.u32 %v1024, 7
  %v1026 = vsub.s32 2, %v1025
  %v1027 = vrot.slane %v938, %v1026
  %v1034 = vlaneseq
  %v1035 = vshrl.u32 %v1034, 7
  %v1036 = vsub.s32 0, %v1035
  %v1037 = vrot.slane %v1007, %v1036
  %v1038 = vlaneseq
  %v1039 = vshrl.u32 %v1038, 7
  %v1040 = vsub.s32 0, %v1039
  %v1041 = vrot.slane %v1011, %v1040
  %v1042 = vlaneseq
  %v1043 = vshrl.u32 %v1042, 7
  %v1044 = vsub.s32 0, %v1043
  %v1045 = vrot.slane %v1015, %v1044
  %v1046 = vlaneseq
  %v1047 = vshrl.u32 %v1046, 7
  %v1048 = vsub.s32 0, %v1047
  %v1049 = vrot.slane %v1019, %v1048
  %v1050 = vlaneseq
  %v1051 = vshrl.u32 %v1050, 7
  %v1052 = vsub.s32 0, %v1051
  %v1053 = vrot.slane %v1023, %v1052
  %v1054 = vlaneseq
  %v1055 = vshrl.u32 %v1054, 7
  %v1056 = vsub.s32 0, %v1055
  %v1057 = vrot.slane %v1027, %v1056
  %v1058 = vmul.f32 %v996, %v1037
  %v1059 = vmul.f32 %v997, %v1041
  %v1060 = vmul.f32 %v998, %v1045
  %v1061 = vmul.f32 %v999, %v1049
  %v1062 = vmul.f32 %v1000, %v1053
  %v1063 = vmul.f32 %v1001, %v1057
  %v1064 = vmul.f32 %v1058, %v1058
  %v1065 = vmul.f32 %v1059, %v1059
  %v1066 = vmul.f32 %v1060, %v1060
  %v1067 = vmul.f32 %v1061, %v1061
  %v1068 = vmul.f32 %v1062, %v1062
  %v1069 = vmul.f32 %v1063, %v1063
  %v1071 = vlaneseq
  %v1072 = vshrl.u32 %v1071, 7
  %v1073 = vsub.s32 0, %v1072
  %v1074 = vrot.slane %v939, %v1073
  %v1075 = vlaneseq
  %v1076 = vshrl.u32 %v1075, 7
  %v1077 = vsub.s32 2, %v1076
  %v1078 = vrot.slane %v939, %v1077
  %v1079 = vlaneseq
  %v1080 = vshrl.u32 %v1079, 7
  %v1081 = vsub.s32 4, %v1080
  %v1082 = vrot.slane %v939, %v1081
  %v1086 = vlaneseq
  %v1087 = vshrl.u32 %v1086, 7
  %v1088 = vsub.s32 0, %v1087
  %v1089 = vrot.slane %v1074, %v1088
  %v1090 = vlaneseq
  %v1091 = vshrl.u32 %v1090, 7
  %v1092 = vsub.s32 0, %v1091
  %v1093 = vrot.slane %v1078, %v1092
  %v1094 = vlaneseq
  %v1095 = vshrl.u32 %v1094, 7
  %v1096 = vsub.s32 0, %v1095
  %v1097 = vrot.slane %v1082, %v1096
  %v1098 = vsub.f32 %v1089, %v1064
  %v1099 = vsub.f32 %v1093, %v1065
  %v1100 = vsub.f32 %v1097, %v1066
  %v1101 = vsub.f32 %v1098, %v1067
  %v1102 = vsub.f32 %v1099, %v1068
  %v1103 = vsub.f32 %v1100, %v1069
  %v1104 = vlaneseq
  %v1105 = vshrl.u32 %v1104, 7
  %v1106 = vsub.s32 1, %v1105
  %v1107 = vrot.slane %v935, %v1106
  %v1108 = vlaneseq
  %v1109 = vshrl.u32 %v1108, 7
  %v1110 = vsub.s32 3, %v1109
  %v1111 = vrot.slane %v935, %v1110
  %v1112 = vlaneseq
  %v1113 = vshrl.u32 %v1112, 7
  %v1114 = vsub.s32 5, %v1113
  %v1115 = vrot.slane %v935, %v1114
  %v1116 = vlaneseq
  %v1117 = vshrl.u32 %v1116, 7
  %v1118 = vsub.s32 7, %v1117
  %v1119 = vrot.slane %v935, %v1118
  %v1120 = vlaneseq
  %v1121 = vshrl.u32 %v1120, 7
  %v1122 = vsub.s32 1, %v1121
  %v1123 = vrot.slane %v936, %v1122
  %v1124 = vlaneseq
  %v1125 = vshrl.u32 %v1124, 7
  %v1126 = vsub.s32 3, %v1125
  %v1127 = vrot.slane %v936, %v1126
  %v1134 = vlaneseq
  %v1135 = vshrl.u32 %v1134, 7
  %v1136 = vsub.s32 1, %v1135
  %v1137 = vrot.slane %v1107, %v1136
  %v1138 = vlaneseq
  %v1139 = vshrl.u32 %v1138, 7
  %v1140 = vsub.s32 1, %v1139
  %v1141 = vrot.slane %v1111, %v1140
  %v1142 = vlaneseq
  %v1143 = vshrl.u32 %v1142, 7
  %v1144 = vsub.s32 1, %v1143
  %v1145 = vrot.slane %v1115, %v1144
  %v1146 = vlaneseq
  %v1147 = vshrl.u32 %v1146, 7
  %v1148 = vsub.s32 1, %v1147
  %v1149 = vrot.slane %v1119, %v1148
  %v1150 = vlaneseq
  %v1151 = vshrl.u32 %v1150, 7
  %v1152 = vsub.s32 1, %v1151
  %v1153 = vrot.slane %v1123, %v1152
  %v1154 = vlaneseq
  %v1155 = vshrl.u32 %v1154, 7
  %v1156 = vsub.s32 1, %v1155
  %v1157 = vrot.slane %v1127, %v1156
  %v1158 = vsub.f32 %v847, %v1137
  %v1159 = vsub.f32 %v849, %v1141
  %v1160 = vsub.f32 %v888, %v1145
  %v1161 = vsub.f32 %v890, %v1149
  %v1162 = vsub.f32 %v929, %v1153
  %v1163 = vsub.f32 %v931, %v1157
  %v1164 = vlaneseq
  %v1165 = vshrl.u32 %v1164, 7
  %v1166 = vsub.s32 1, %v1165
  %v1167 = vrot.slane %v937, %v1166
  %v1168 = vlaneseq
  %v1169 = vshrl.u32 %v1168, 7
  %v1170 = vsub.s32 3, %v1169
  %v1171 = vrot.slane %v937, %v1170
  %v1172 = vlaneseq
  %v1173 = vshrl.u32 %v1172, 7
  %v1174 = vsub.s32 5, %v1173
  %v1175 = vrot.slane %v937, %v1174
  %v1176 = vlaneseq
  %v1177 = vshrl.u32 %v1176, 7
  %v1178 = vsub.s32 7, %v1177
  %v1179 = vrot.slane %v937, %v1178
  %v1180 = vlaneseq
  %v1181 = vshrl.u32 %v1180, 7
  %v1182 = vsub.s32 1, %v1181
  %v1183 = vrot.slane %v938, %v1182
  %v1184 = vlaneseq
  %v1185 = vshrl.u32 %v1184, 7
  %v1186 = vsub.s32 3, %v1185
  %v1187 = vrot.slane %v938, %v1186
  %v1194 = vlaneseq
  %v1195 = vshrl.u32 %v1194, 7
  %v1196 = vsub.s32 1, %v1195
  %v1197 = vrot.slane %v1167, %v1196
  %v1198 = vlaneseq
  %v1199 = vshrl.u32 %v1198, 7
  %v1200 = vsub.s32 1, %v1199
  %v1201 = vrot.slane %v1171, %v1200
  %v1202 = vlaneseq
  %v1203 = vshrl.u32 %v1202, 7
  %v1204 = vsub.s32 1, %v1203
  %v1205 = vrot.slane %v1175, %v1204
  %v1206 = vlaneseq
  %v1207 = vshrl.u32 %v1206, 7
  %v1208 = vsub.s32 1, %v1207
  %v1209 = vrot.slane %v1179, %v1208
  %v1210 = vlaneseq
  %v1211 = vshrl.u32 %v1210, 7
  %v1212 = vsub.s32 1, %v1211
  %v1213 = vrot.slane %v1183, %v1212
  %v1214 = vlaneseq
  %v1215 = vshrl.u32 %v1214, 7
  %v1216 = vsub.s32 1, %v1215
  %v1217 = vrot.slane %v1187, %v1216
  %v1218 = vmul.f32 %v1158, %v1197
  %v1219 = vmul.f32 %v1159, %v1201
  %v1220 = vmul.f32 %v1160, %v1205
  %v1221 = vmul.f32 %v1161, %v1209
  %v1222 = vmul.f32 %v1162, %v1213
  %v1223 = vmul.f32 %v1163, %v1217
  %v1224 = vmul.f32 %v1218, %v1218
  %v1225 = vmul.f32 %v1219, %v1219
  %v1226 = vmul.f32 %v1220, %v1220
  %v1227 = vmul.f32 %v1221, %v1221
  %v1228 = vmul.f32 %v1222, %v1222
  %v1229 = vmul.f32 %v1223, %v1223
  %v1230 = vlaneseq
  %v1231 = vshrl.u32 %v1230, 7
  %v1232 = vsub.s32 1, %v1231
  %v1233 = vrot.slane %v939, %v1232
  %v1234 = vlaneseq
  %v1235 = vshrl.u32 %v1234, 7
  %v1236 = vsub.s32 3, %v1235
  %v1237 = vrot.slane %v939, %v1236
  %v1238 = vlaneseq
  %v1239 = vshrl.u32 %v1238, 7
  %v1240 = vsub.s32 5, %v1239
  %v1241 = vrot.slane %v939, %v1240
  %v1245 = vlaneseq
  %v1246 = vshrl.u32 %v1245, 7
  %v1247 = vsub.s32 1, %v1246
  %v1248 = vrot.slane %v1233, %v1247
  %v1249 = vlaneseq
  %v1250 = vshrl.u32 %v1249, 7
  %v1251 = vsub.s32 1, %v1250
  %v1252 = vrot.slane %v1237, %v1251
  %v1253 = vlaneseq
  %v1254 = vshrl.u32 %v1253, 7
  %v1255 = vsub.s32 1, %v1254
  %v1256 = vrot.slane %v1241, %v1255
  %v1257 = vsub.f32 %v1248, %v1224
  %v1258 = vsub.f32 %v1252, %v1225
  %v1259 = vsub.f32 %v1256, %v1226
  %v1260 = vsub.f32 %v1257, %v1227
  %v1261 = vsub.f32 %v1258, %v1228
  %v1262 = vsub.f32 %v1259, %v1229
  %v1263 = vmax.f32 %v1101, %v1260
  %v1264 = vmax.f32 %v1102, %v1261
  %v1265 = vmax.f32 %v1103, %v1262
  %v1266 = vsub.f32 %v1101, %v1260
  %v1267 = vsub.f32 %v1102, %v1261
  %v1268 = vsub.f32 %v1103, %v1262
  %v1269 = vand.u32 2147483647, %v1266
  %v1270 = vand.u32 2147483647, %v1267
  %v1271 = vand.u32 2147483647, %v1268
  %v1272 = vsub.f32 0.0, %v1269
  %v1273 = vsub.f32 0.0, %v1270
  %v1274 = vsub.f32 0.0, %v1271
  %v1275 = vmul.f32 %v1272, 1.442695
  %v1276 = vpow.pop %v1275
  %v1277 = vmul.f32 %v1273, 1.442695
  %v1278 = vpow.pop %v1277
  %v1279 = vmul.f32 %v1274, 1.442695
  %v1280 = vpow.pop %v1279
  %v1281 = vadd.f32 %v1276, 1.0
  %v1282 = vadd.f32 %v1278, 1.0
  %v1283 = vadd.f32 %v1280, 1.0
  %v1284 = vlog2.pop %v1281
  %v1285 = vmul.f32 %v1284, 0.6931472
  %v1286 = vlog2.pop %v1282
  %v1287 = vmul.f32 %v1286, 0.6931472
  %v1288 = vlog2.pop %v1283
  %v1289 = vmul.f32 %v1288, 0.6931472
  %v1290 = vadd.f32 %v1263, %v1285
  %v1291 = vadd.f32 %v1264, %v1287
  %v1292 = vadd.f32 %v1265, %v1289
  %v1293 = vld [vmem:[%s7] sm:$0xff]
  %v1294 = vld [vmem:[%s7 + $0x8] sm:$0xff]
  %v1295 = vld [vmem:[%s7 + $0x10] sm:$0xff]
  %v1296 = vld [vmem:[%s7 + $0x18] sm:$0xff]
  %v1297 = vld [vmem:[%s7 + $0x20] sm:$0xff]
  %v1298 = vld [vmem:[%s7 + $0x28] sm:$0xff]
  %v1299 = vld [vmem:[%s7 + $0x30] sm:$0xff]
  %v1300 = vld [vmem:[%s7 + $0x38] sm:$0xff]
  %v1301 = vld [vmem:[%s7 + $0x40] sm:$0xff]
  %v1302 = vld [vmem:[%s7 + $0x48] sm:$0xff]
  %v1303 = vld [vmem:[%s7 + $0x50] sm:$0xff]
  %v1304 = vld [vmem:[%s7 + $0x58] sm:$0xff]
  %v1305 = vld [vmem:[%s7 + $0x60] sm:$0xff]
  %v1306 = vld [vmem:[%s7 + $0x68] sm:$0xff]
  %v1307 = vld [vmem:[%s7 + $0x70] sm:$0xff]
  %v1308 = vld [vmem:[%s7 + $0x78] sm:$0xff]
  %v1309 = vld [vmem:[%s7 + $0x80] sm:$0xff]
  %v1310 = vld [vmem:[%s7 + $0x88] sm:$0xff]
  %v1311 = vld [vmem:[%s7 + $0x90] sm:$0xff]
  %v1312 = vld [vmem:[%s7 + $0x98] sm:$0xff]
  %v1313 = vld [vmem:[%s7 + $0xa0] sm:$0xff]
  %v1314 = vld [vmem:[%s7 + $0xa8] sm:$0xff]
  %v1315 = vld [vmem:[%s7 + $0xb0] sm:$0xff]
  %v1316 = vld [vmem:[%s7 + $0xb8] sm:$0xff]
  %v1317 = vld [vmem:[%s7 + $0xc0] sm:$0xff]
  %v1318 = vld [vmem:[%s7 + $0xc8] sm:$0xff]
  %v1319 = vld [vmem:[%s7 + $0xd0] sm:$0xff]
  %v1320 = vld [vmem:[%s7 + $0xd8] sm:$0xff]
  %v1321 = vld [vmem:[%s7 + $0xe0] sm:$0xff]
  %v1322 = vld [vmem:[%s7 + $0xe8] sm:$0xff]
  %v1323 = vld [vmem:[%s7 + $0xf0] sm:$0xff]
  %v1324 = vld [vmem:[%s7 + $0xf8] sm:$0xff]
  %v1325 = vld [vmem:[%s7 + $0x100] sm:$0xff]
  %v1326 = vld [vmem:[%s7 + $0x108] sm:$0xff]
  %v1327 = vld [vmem:[%s7 + $0x110] sm:$0xff]
  %v1328 = vld [vmem:[%s7 + $0x118] sm:$0xff]
  %v1329 = vld [vmem:[%s7 + $0x120] sm:$0xff]
  %v1330 = vld [vmem:[%s7 + $0x128] sm:$0xff]
  %v1331 = vld [vmem:[%s7 + $0x130] sm:$0xff]
  %v1332 = vld [vmem:[%s7 + $0x138] sm:$0xff]
  %v1333 = vld [vmem:[%s7 + $0x140] sm:$0xff]
  %v1334 = vld [vmem:[%s7 + $0x148] sm:$0xff]
  %v1335 = vld [vmem:[%s7 + $0x150] sm:$0xff]
  %v1336 = vld [vmem:[%s7 + $0x158] sm:$0xff]
  %v1337 = vld [vmem:[%s7 + $0x160] sm:$0xff]
  %v1338 = vld [vmem:[%s7 + $0x168] sm:$0xff]
  %v1339 = vld [vmem:[%s7 + $0x170] sm:$0xff]
  %v1340 = vld [vmem:[%s7 + $0x178] sm:$0xff]
  %v1341 = vld [vmem:[%s8] sm:$0x1]
  %v1343 = vlaneseq
  %v1344 = vshrl.u32 %v1343, 7
  %v1345 = vsub.s32 0, %v1344
  %v1346 = vrot.slane %v1341, %v1345
  %1348 = vmatprep.subr.mxu0 0.0
  %1349 = vmatpush1.msra.mxu0 %v1293
  %1350 = vmatprep.subr.mxu0 0.0
  %1351 = vmatpush1.msra.mxu0 %v1294
  %1352 = vmatprep.subr.mxu0 0.0
  %1353 = vmatpush1.msra.mxu0 %v1295
  %1354 = vmatprep.subr.mxu0 0.0
  %1355 = vmatpush1.msra.mxu0 %v1296
  %1356 = vmatprep.subr.mxu0 0.0
  %1357 = vmatpush1.msra.mxu0 %v1297
  %1358 = vmatprep.subr.mxu0 0.0
  %1359 = vmatpush1.msra.mxu0 %v1298
  %1360 = vmatprep.subr.mxu0 0.0
  %1361 = vmatpush1.msra.mxu0 %v1299
  %1362 = vmatprep.subr.mxu0 0.0
  %1363 = vmatpush1.msra.mxu0 %v1300
  %1364 = vmatprep.subr.mxu0 0.0
  %1365 = vmatpush1.msra.mxu0 %v1301
  %1366 = vmatprep.subr.mxu0 0.0
  %1367 = vmatpush1.msra.mxu0 %v1302
  %1368 = vmatprep.subr.mxu0 0.0
  %1369 = vmatpush1.msra.mxu0 %v1303
  %1370 = vmatprep.subr.mxu0 0.0
  %1371 = vmatpush1.msra.mxu0 %v1304
  %1372 = vmatprep.subr.mxu0 0.0
  %1373 = vmatpush1.msra.mxu0 %v1305
  %1374 = vmatprep.subr.mxu0 0.0
  %1375 = vmatpush1.msra.mxu0 %v1306
  %1376 = vmatprep.subr.mxu0 0.0
  %1377 = vmatpush1.msra.mxu0 %v1307
  %1378 = vmatprep.subr.mxu0 0.0
  %1379 = vmatpush1.msra.mxu0 %v1308
  %1380 = vmatprep.subr.mxu0 0.0
  %1381 = vmatpush1.msra.mxu0 %v1309
  %1382 = vmatprep.subr.mxu0 0.0
  %1383 = vmatpush1.msra.mxu0 %v1310
  %1384 = vmatprep.subr.mxu0 0.0
  %1385 = vmatpush1.msra.mxu0 %v1311
  %1386 = vmatprep.subr.mxu0 0.0
  %1387 = vmatpush1.msra.mxu0 %v1312
  %1388 = vmatprep.subr.mxu0 0.0
  %1389 = vmatpush1.msra.mxu0 %v1313
  %1390 = vmatprep.subr.mxu0 0.0
  %1391 = vmatpush1.msra.mxu0 %v1314
  %1392 = vmatprep.subr.mxu0 0.0
  %1393 = vmatpush1.msra.mxu0 %v1315
  %1394 = vmatprep.subr.mxu0 0.0
  %1395 = vmatpush1.msra.mxu0 %v1316
  %1396 = vmatprep.subr.mxu0 0.0
  %1397 = vmatpush1.msra.mxu0 %v1317
  %1398 = vmatprep.subr.mxu0 0.0
  %1399 = vmatpush1.msra.mxu0 %v1318
  %1400 = vmatprep.subr.mxu0 0.0
  %1401 = vmatpush1.msra.mxu0 %v1319
  %1402 = vmatprep.subr.mxu0 0.0
  %1403 = vmatpush1.msra.mxu0 %v1320
  %1404 = vmatprep.subr.mxu0 0.0
  %1405 = vmatpush1.msra.mxu0 %v1321
  %1406 = vmatprep.subr.mxu0 0.0
  %1407 = vmatpush1.msra.mxu0 %v1322
  %1408 = vmatprep.subr.mxu0 0.0
  %1409 = vmatpush1.msra.mxu0 %v1323
  %1410 = vmatprep.subr.mxu0 0.0
  %1411 = vmatpush1.msra.mxu0 %v1324
  %1412 = vmatprep.mubr.f32.mxu0 %v1291
  %1413 = vmatmul.mubr.f32.gmra.mrb[0].mxu0 %v1290
  %v1414 = vpop.f32.mrb[0].mxu0
  %v1415 = vadd.f32 %v1346, %v1414
  %v1416 = vpop.f32.mrb[0].mxu0
  %1417 = vdwg.mxu0
  %1418 = vmatprep.subr.mxu0 0.0
  %1419 = vmatpush1.msra.mxu0 %v1325
  %1420 = vmatprep.subr.mxu0 0.0
  %1421 = vmatpush1.msra.mxu0 %v1326
  %1422 = vmatprep.subr.mxu0 0.0
  %1423 = vmatpush1.msra.mxu0 %v1327
  %1424 = vmatprep.subr.mxu0 0.0
  %1425 = vmatpush1.msra.mxu0 %v1328
  %1426 = vmatprep.subr.mxu0 0.0
  %1427 = vmatpush1.msra.mxu0 %v1329
  %1428 = vmatprep.subr.mxu0 0.0
  %1429 = vmatpush1.msra.mxu0 %v1330
  %1430 = vmatprep.subr.mxu0 0.0
  %1431 = vmatpush1.msra.mxu0 %v1331
  %1432 = vmatprep.subr.mxu0 0.0
  %1433 = vmatpush1.msra.mxu0 %v1332
  %1434 = vmatprep.subr.mxu0 0.0
  %1435 = vmatpush1.msra.mxu0 %v1333
  %1436 = vmatprep.subr.mxu0 0.0
  %1437 = vmatpush1.msra.mxu0 %v1334
  %1438 = vmatprep.subr.mxu0 0.0
  %1439 = vmatpush1.msra.mxu0 %v1335
  %1440 = vmatprep.subr.mxu0 0.0
  %1441 = vmatpush1.msra.mxu0 %v1336
  %1442 = vmatprep.subr.mxu0 0.0
  %1443 = vmatpush1.msra.mxu0 %v1337
  %1444 = vmatprep.subr.mxu0 0.0
  %1445 = vmatpush1.msra.mxu0 %v1338
  %1446 = vmatprep.subr.mxu0 0.0
  %1447 = vmatpush1.msra.mxu0 %v1339
  %1448 = vmatprep.subr.mxu0 0.0
  %1449 = vmatpush1.msra.mxu0 %v1340
  %1450 = vmatprep.subr.mxu0 0.0
  %1451 = vmatpush1.msra.mxu0 0.0
  %1452 = vmatprep.subr.mxu0 0.0
  %1453 = vmatpush1.msra.mxu0 0.0
  %1454 = vmatprep.subr.mxu0 0.0
  %1455 = vmatpush1.msra.mxu0 0.0
  %1456 = vmatprep.subr.mxu0 0.0
  %1457 = vmatpush1.msra.mxu0 0.0
  %1458 = vmatprep.subr.mxu0 0.0
  %1459 = vmatpush1.msra.mxu0 0.0
  %1460 = vmatprep.subr.mxu0 0.0
  %1461 = vmatpush1.msra.mxu0 0.0
  %1462 = vmatprep.subr.mxu0 0.0
  %1463 = vmatpush1.msra.mxu0 0.0
  %1464 = vmatprep.subr.mxu0 0.0
  %1465 = vmatpush1.msra.mxu0 0.0
  %1466 = vmatprep.subr.mxu0 0.0
  %1467 = vmatpush1.msra.mxu0 0.0
  %1468 = vmatprep.subr.mxu0 0.0
  %1469 = vmatpush1.msra.mxu0 0.0
  %1470 = vmatprep.subr.mxu0 0.0
  %1471 = vmatpush1.msra.mxu0 0.0
  %1472 = vmatprep.subr.mxu0 0.0
  %1473 = vmatpush1.msra.mxu0 0.0
  %1474 = vmatprep.subr.mxu0 0.0
  %1475 = vmatpush1.msra.mxu0 0.0
  %1476 = vmatprep.subr.mxu0 0.0
  %1477 = vmatpush1.msra.mxu0 0.0
  %1478 = vmatprep.subr.mxu0 0.0
  %1479 = vmatpush1.msra.mxu0 0.0
  %1480 = vmatprep.subr.mxu0 0.0
  %1481 = vmatpush1.msra.mxu0 0.0
  %1482 = vmatprep.mubr.f32.mxu0 0.0
  %1483 = vmatmul.mubr.f32.gmra.mrb[0].mxu0 %v1292
  %v1484 = vpop.f32.mrb[0].mxu0
  %v1485 = vadd.f32 %v1415, %v1484
  %v1486 = vpop.f32.mrb[0].mxu0
  %1487 = vdwg.mxu0
  %1489 = vrot.lane.b32.xlu0 %v1485, 124
  %v1490 = vpop.permute.xlu0 %1489
  %v1492 = vmax.f32 %v1485, %v1490
  %1493 = vrot.lane.b32.xlu0 %v1485, 120
  %v1494 = vpop.permute.xlu0 %1493
  %v1496 = vmax.f32 %v1492, %v1494
  %1497 = vrot.lane.b32.xlu0 %v1485, 116
  %v1498 = vpop.permute.xlu0 %1497
  %v1500 = vmax.f32 %v1496, %v1498
  %1501 = vrot.lane.b32.xlu0 %v1485, 112
  %v1502 = vpop.permute.xlu0 %1501
  %v1504 = vmax.f32 %v1500, %v1502
  %1505 = vrot.lane.b32.xlu0 %v1485, 108
  %v1506 = vpop.permute.xlu0 %1505
  %v1508 = vmax.f32 %v1504, %v1506
  %1509 = vrot.lane.b32.xlu0 %v1485, 104
  %v1510 = vpop.permute.xlu0 %1509
  %v1512 = vmax.f32 %v1508, %v1510
  %1513 = vrot.lane.b32.xlu0 %v1485, 100
  %v1514 = vpop.permute.xlu0 %1513
  %v1516 = vmax.f32 %v1512, %v1514
  %1517 = vrot.lane.b32.xlu0 %v1485, 96
  %v1518 = vpop.permute.xlu0 %1517
  %v1520 = vmax.f32 %v1516, %v1518
  %1521 = vrot.lane.b32.xlu0 %v1485, 92
  %v1522 = vpop.permute.xlu0 %1521
  %v1524 = vmax.f32 %v1520, %v1522
  %v1525 = vld [vmem:[%s9] sm:$0xf]
  %vm1526 = vcmask 31744
  %v1528 = vsel %vm1526, %v1524, 0
  %vm1530 = vcmask 1043456
  %v1532 = vsel %vm1530, %v1525, 0
  %1534 = vmatprep.subr.mxu0 0.0
  %1535 = vmatpush1.msra.mxu0 %v1532
  %1536 = vmatprep.subr.mxu0 0.0
  %1537 = vmatpush1.msra.mxu0 0.0
  %1538 = vmatprep.subr.mxu0 0.0
  %1539 = vmatpush1.msra.mxu0 0.0
  %1540 = vmatprep.subr.mxu0 0.0
  %1541 = vmatpush1.msra.mxu0 0.0
  %1542 = vmatprep.subr.mxu0 0.0
  %1543 = vmatpush1.msra.mxu0 0.0
  %1544 = vmatprep.subr.mxu0 0.0
  %1545 = vmatpush1.msra.mxu0 0.0
  %1546 = vmatprep.subr.mxu0 0.0
  %1547 = vmatpush1.msra.mxu0 0.0
  %1548 = vmatprep.subr.mxu0 0.0
  %1549 = vmatpush1.msra.mxu0 0.0
  %1550 = vmatprep.subr.mxu0 0.0
  %1551 = vmatpush1.msra.mxu0 0.0
  %1552 = vmatprep.subr.mxu0 0.0
  %1553 = vmatpush1.msra.mxu0 0.0
  %1554 = vmatprep.subr.mxu0 0.0
  %1555 = vmatpush1.msra.mxu0 0.0
  %1556 = vmatprep.subr.mxu0 0.0
  %1557 = vmatpush1.msra.mxu0 0.0
  %1558 = vmatprep.subr.mxu0 0.0
  %1559 = vmatpush1.msra.mxu0 0.0
  %1560 = vmatprep.subr.mxu0 0.0
  %1561 = vmatpush1.msra.mxu0 0.0
  %1562 = vmatprep.subr.mxu0 0.0
  %1563 = vmatpush1.msra.mxu0 0.0
  %1564 = vmatprep.subr.mxu0 0.0
  %1565 = vmatpush1.msra.mxu0 0.0
  %1566 = vmatprep.subr.mxu0 0.0
  %1567 = vmatpush1.msra.mxu0 0.0
  %1568 = vmatprep.subr.mxu0 0.0
  %1569 = vmatpush1.msra.mxu0 0.0
  %1570 = vmatprep.subr.mxu0 0.0
  %1571 = vmatpush1.msra.mxu0 0.0
  %1572 = vmatprep.subr.mxu0 0.0
  %1573 = vmatpush1.msra.mxu0 0.0
  %1574 = vmatprep.subr.mxu0 0.0
  %1575 = vmatpush1.msra.mxu0 0.0
  %1576 = vmatprep.subr.mxu0 0.0
  %1577 = vmatpush1.msra.mxu0 0.0
  %1578 = vmatprep.subr.mxu0 0.0
  %1579 = vmatpush1.msra.mxu0 0.0
  %1580 = vmatprep.subr.mxu0 0.0
  %1581 = vmatpush1.msra.mxu0 0.0
  %1582 = vmatprep.subr.mxu0 0.0
  %1583 = vmatpush1.msra.mxu0 0.0
  %1584 = vmatprep.subr.mxu0 0.0
  %1585 = vmatpush1.msra.mxu0 0.0
  %1586 = vmatprep.subr.mxu0 0.0
  %1587 = vmatpush1.msra.mxu0 0.0
  %1588 = vmatprep.subr.mxu0 0.0
  %1589 = vmatpush1.msra.mxu0 0.0
  %1590 = vmatprep.subr.mxu0 0.0
  %1591 = vmatpush1.msra.mxu0 0.0
  %1592 = vmatprep.subr.mxu0 0.0
  %1593 = vmatpush1.msra.mxu0 0.0
  %1594 = vmatprep.subr.mxu0 0.0
  %1595 = vmatpush1.msra.mxu0 0.0
  %1596 = vmatprep.subr.mxu0 0.0
  %1597 = vmatpush1.msra.mxu0 0.0
  %1598 = vmatprep.mubr.f32.mxu0 0.0
  %1599 = vmatmul.mubr.f32.gmra.mrb[0].mxu0 %v1528
  %v1600 = vpop.f32.mrb[0].mxu0
  %v1601 = vadd.f32 0.0, %v1600
  %v1602 = vpop.f32.mrb[0].mxu0
  %1603 = vdwg.mxu0
  %v1604 = vsub.f32 %v1485, %v1601
  %v1605 = vmul.f32 %v1604, 1.442695
  %v1606 = vpow.pop %v1605
  %v1607 = vld [vmem:[%s10] sm:$0xff]
  %v1608 = vld [vmem:[%s10 + $0x8] sm:$0xff]
  %v1609 = vld [vmem:[%s10 + $0x10] sm:$0xff]
  %v1610 = vld [vmem:[%s10 + $0x18] sm:$0xff]
  %v1611 = vld [vmem:[%s10 + $0x20] sm:$0xff]
  %v1612 = vld [vmem:[%s10 + $0x28] sm:$0xff]
  %v1613 = vld [vmem:[%s10 + $0x30] sm:$0xff]
  %v1614 = vld [vmem:[%s10 + $0x38] sm:$0xff]
  %v1615 = vld [vmem:[%s10 + $0x40] sm:$0xff]
  %v1616 = vld [vmem:[%s10 + $0x48] sm:$0xff]
  %v1617 = vld [vmem:[%s10 + $0x50] sm:$0xff]
  %v1618 = vld [vmem:[%s10 + $0x58] sm:$0xff]
  %v1619 = vld [vmem:[%s10 + $0x60] sm:$0xff]
  %v1620 = vld [vmem:[%s10 + $0x68] sm:$0xff]
  %v1621 = vld [vmem:[%s10 + $0x70] sm:$0xff]
  %v1622 = vld [vmem:[%s10 + $0x78] sm:$0xff]
  %1623 = vmatprep.subr.mxu0 0.0
  %1624 = vmatpush1.msra.mxu0 %v1607
  %1625 = vmatprep.subr.mxu0 0.0
  %1626 = vmatpush1.msra.mxu0 %v1608
  %1627 = vmatprep.subr.mxu0 0.0
  %1628 = vmatpush1.msra.mxu0 %v1609
  %1629 = vmatprep.subr.mxu0 0.0
  %1630 = vmatpush1.msra.mxu0 %v1610
  %1631 = vmatprep.subr.mxu0 0.0
  %1632 = vmatpush1.msra.mxu0 %v1611
  %1633 = vmatprep.subr.mxu0 0.0
  %1634 = vmatpush1.msra.mxu0 %v1612
  %1635 = vmatprep.subr.mxu0 0.0
  %1636 = vmatpush1.msra.mxu0 %v1613
  %1637 = vmatprep.subr.mxu0 0.0
  %1638 = vmatpush1.msra.mxu0 %v1614
  %1639 = vmatprep.subr.mxu0 0.0
  %1640 = vmatpush1.msra.mxu0 %v1615
  %1641 = vmatprep.subr.mxu0 0.0
  %1642 = vmatpush1.msra.mxu0 %v1616
  %1643 = vmatprep.subr.mxu0 0.0
  %1644 = vmatpush1.msra.mxu0 %v1617
  %1645 = vmatprep.subr.mxu0 0.0
  %1646 = vmatpush1.msra.mxu0 %v1618
  %1647 = vmatprep.subr.mxu0 0.0
  %1648 = vmatpush1.msra.mxu0 %v1619
  %1649 = vmatprep.subr.mxu0 0.0
  %1650 = vmatpush1.msra.mxu0 %v1620
  %1651 = vmatprep.subr.mxu0 0.0
  %1652 = vmatpush1.msra.mxu0 %v1621
  %1653 = vmatprep.subr.mxu0 0.0
  %1654 = vmatpush1.msra.mxu0 %v1622
  %1655 = vmatprep.subr.mxu0 0.0
  %1656 = vmatpush1.msra.mxu0 0.0
  %1657 = vmatprep.subr.mxu0 0.0
  %1658 = vmatpush1.msra.mxu0 0.0
  %1659 = vmatprep.subr.mxu0 0.0
  %1660 = vmatpush1.msra.mxu0 0.0
  %1661 = vmatprep.subr.mxu0 0.0
  %1662 = vmatpush1.msra.mxu0 0.0
  %1663 = vmatprep.subr.mxu0 0.0
  %1664 = vmatpush1.msra.mxu0 0.0
  %1665 = vmatprep.subr.mxu0 0.0
  %1666 = vmatpush1.msra.mxu0 0.0
  %1667 = vmatprep.subr.mxu0 0.0
  %1668 = vmatpush1.msra.mxu0 0.0
  %1669 = vmatprep.subr.mxu0 0.0
  %1670 = vmatpush1.msra.mxu0 0.0
  %1671 = vmatprep.subr.mxu0 0.0
  %1672 = vmatpush1.msra.mxu0 0.0
  %1673 = vmatprep.subr.mxu0 0.0
  %1674 = vmatpush1.msra.mxu0 0.0
  %1675 = vmatprep.subr.mxu0 0.0
  %1676 = vmatpush1.msra.mxu0 0.0
  %1677 = vmatprep.subr.mxu0 0.0
  %1678 = vmatpush1.msra.mxu0 0.0
  %1679 = vmatprep.subr.mxu0 0.0
  %1680 = vmatpush1.msra.mxu0 0.0
  %1681 = vmatprep.subr.mxu0 0.0
  %1682 = vmatpush1.msra.mxu0 0.0
  %1683 = vmatprep.subr.mxu0 0.0
  %1684 = vmatpush1.msra.mxu0 0.0
  %1685 = vmatprep.subr.mxu0 0.0
  %1686 = vmatpush1.msra.mxu0 0.0
  %1687 = vmatprep.mubr.f32.mxu0 0.0
  %1688 = vmatmul.mubr.f32.gmra.mrb[0].mxu0 %v1606
  %v1689 = vpop.f32.mrb[0].mxu0
  %v1690 = vadd.f32 0.0, %v1689
  %v1691 = vpop.f32.mrb[0].mxu0
  %1692 = vdwg.mxu0
  %v1693 = vlog2.pop %v1690
  %v1694 = vmul.f32 %v1693, 0.6931472
  %v1696 = vsel %vm1526, %v1694, 0
  %1698 = vmatprep.subr.mxu0 0.0
  %1699 = vmatpush1.msra.mxu0 %v1532
  %1700 = vmatprep.subr.mxu0 0.0
  %1701 = vmatpush1.msra.mxu0 0.0
  %1702 = vmatprep.subr.mxu0 0.0
  %1703 = vmatpush1.msra.mxu0 0.0
  %1704 = vmatprep.subr.mxu0 0.0
  %1705 = vmatpush1.msra.mxu0 0.0
  %1706 = vmatprep.subr.mxu0 0.0
  %1707 = vmatpush1.msra.mxu0 0.0
  %1708 = vmatprep.subr.mxu0 0.0
  %1709 = vmatpush1.msra.mxu0 0.0
  %1710 = vmatprep.subr.mxu0 0.0
  %1711 = vmatpush1.msra.mxu0 0.0
  %1712 = vmatprep.subr.mxu0 0.0
  %1713 = vmatpush1.msra.mxu0 0.0
  %1714 = vmatprep.subr.mxu0 0.0
  %1715 = vmatpush1.msra.mxu0 0.0
  %1716 = vmatprep.subr.mxu0 0.0
  %1717 = vmatpush1.msra.mxu0 0.0
  %1718 = vmatprep.subr.mxu0 0.0
  %1719 = vmatpush1.msra.mxu0 0.0
  %1720 = vmatprep.subr.mxu0 0.0
  %1721 = vmatpush1.msra.mxu0 0.0
  %1722 = vmatprep.subr.mxu0 0.0
  %1723 = vmatpush1.msra.mxu0 0.0
  %1724 = vmatprep.subr.mxu0 0.0
  %1725 = vmatpush1.msra.mxu0 0.0
  %1726 = vmatprep.subr.mxu0 0.0
  %1727 = vmatpush1.msra.mxu0 0.0
  %1728 = vmatprep.subr.mxu0 0.0
  %1729 = vmatpush1.msra.mxu0 0.0
  %1730 = vmatprep.subr.mxu0 0.0
  %1731 = vmatpush1.msra.mxu0 0.0
  %1732 = vmatprep.subr.mxu0 0.0
  %1733 = vmatpush1.msra.mxu0 0.0
  %1734 = vmatprep.subr.mxu0 0.0
  %1735 = vmatpush1.msra.mxu0 0.0
  %1736 = vmatprep.subr.mxu0 0.0
  %1737 = vmatpush1.msra.mxu0 0.0
  %1738 = vmatprep.subr.mxu0 0.0
  %1739 = vmatpush1.msra.mxu0 0.0
  %1740 = vmatprep.subr.mxu0 0.0
  %1741 = vmatpush1.msra.mxu0 0.0
  %1742 = vmatprep.subr.mxu0 0.0
  %1743 = vmatpush1.msra.mxu0 0.0
  %1744 = vmatprep.subr.mxu0 0.0
  %1745 = vmatpush1.msra.mxu0 0.0
  %1746 = vmatprep.subr.mxu0 0.0
  %1747 = vmatpush1.msra.mxu0 0.0
  %1748 = vmatprep.subr.mxu0 0.0
  %1749 = vmatpush1.msra.mxu0 0.0
  %1750 = vmatprep.subr.mxu0 0.0
  %1751 = vmatpush1.msra.mxu0 0.0
  %1752 = vmatprep.subr.mxu0 0.0
  %1753 = vmatpush1.msra.mxu0 0.0
  %1754 = vmatprep.subr.mxu0 0.0
  %1755 = vmatpush1.msra.mxu0 0.0
  %1756 = vmatprep.subr.mxu0 0.0
  %1757 = vmatpush1.msra.mxu0 0.0
  %1758 = vmatprep.subr.mxu0 0.0
  %1759 = vmatpush1.msra.mxu0 0.0
  %1760 = vmatprep.subr.mxu0 0.0
  %1761 = vmatpush1.msra.mxu0 0.0
  %1762 = vmatprep.mubr.f32.mxu0 0.0
  %1763 = vmatmul.mubr.f32.gmra.mrb[0].mxu0 %v1696
  %v1764 = vpop.f32.mrb[0].mxu0
  %v1765 = vadd.f32 0.0, %v1764
  %v1766 = vpop.f32.mrb[0].mxu0
  %1767 = vdwg.mxu0
  %v1768 = vadd.f32 %v1601, %v1765
  %v1769 = vsub.f32 %v1485, %v1768
  %1770 = vst [vmem:[%s11] sm:$0xff] %v1769
  // Predicated region
  $region46: #{spnnet_forward.1} parent=0 // pred_check
    _
  $region47: #{spnnet_forward.1} parent=0 // pred_check_branch
    %1772 = sbr.rel (0) target = $region49
  $region48: #{spnnet_forward.1} parent=0 // pred_region
    _
  $region49: #{spnnet_forward.1} parent=0 // pred_fallthru
    _
  // Predicated region
  $region50: #{spnnet_forward.1} parent=0 // pred_check
    _
  $region51: #{spnnet_forward.1} parent=0 // pred_check_branch
    %1774 = sbr.rel (0) target = $region53
  $region52: #{spnnet_forward.1} parent=0 // pred_region
    _
  $region53: #{spnnet_forward.1} parent=0 // pred_fallthru
    _

</llo_original>
